<compile_context>
chip_gen: v7x
topology: tpu7x:2x2x1
jax: 0.10.0
libtpu: 0.0.40
codegen_flags: <defaults>
</compile_context>

<pallas_src>
import math

import jax
import jax.numpy as jnp
from jax import lax
from jax.experimental import pallas as pl
from jax.experimental.pallas import tpu as pltpu

# ------------------------------ config ---------------------------------------
HIDDEN = 32
NUM_HEADS = 4
HEAD_DIM = HIDDEN // NUM_HEADS          # 8
SEQ = 8
BATCH = 2
LN_EPS = 1e-12
NEG_INF = -10000.0

LANE = 128
D_PAD = LANE                            # hidden padded to one full 128-lane group
HD_PAD = D_PAD // NUM_HEADS             # per-head dim padded 8 -> 32 (4 heads * 32 = 128)


# ------------------------------ Pallas kernel ---------------------------------
def bert_attention_kernel(x_ref, mask_ref, wqkv_ref, bqkv_ref, wo_ref, bo_ref,
                          g_ref, beta_ref, out_ref):
    BH, L, _ = mask_ref.shape            # (B*H, L, L)
    B = BH // NUM_HEADS

    x = x_ref[...]                       # (B*L, D_PAD); lanes >= HIDDEN are exactly 0
    xr = x[:, :HIDDEN]                   # real hidden lanes feed the projections

    # Fused QKV projection; contraction over the true hidden (32) only.
    # Output columns are head-major padded: [q | k | v], each D_PAD wide; within each,
    # head h occupies lanes [h*HD_PAD, h*HD_PAD + HEAD_DIM) and the rest are zero.
    # (1/sqrt(head_dim) is pre-folded into Wq / bq on host.)
    qkv = jnp.dot(xr, wqkv_ref[...], preferred_element_type=jnp.float32) + bqkv_ref[...]
    q = qkv[:, 0 * D_PAD:1 * D_PAD]
    k = qkv[:, 1 * D_PAD:2 * D_PAD]
    v = qkv[:, 2 * D_PAD:3 * D_PAD]

    # (B*L, D_PAD) -> (B*H, L, HD_PAD).  Padded head dims are zero in q/k/v, so they
    # contribute nothing to the scores or to the context.
    def split_heads(t):
        parts = []
        for b in range(B):                                  # unrolled at trace time (B=2)
            tb = t[b * L:(b + 1) * L]                       # (L, D_PAD)
            parts.append(jnp.swapaxes(tb.reshape(L, NUM_HEADS, HD_PAD), 0, 1))
        return jnp.concatenate(parts, axis=0)               # (B*H, L, HD_PAD)

    qh, kh, vh = split_heads(q), split_heads(k), split_heads(v)

    s = jnp.einsum('nqd,nkd->nqk', qh, kh,
                   preferred_element_type=jnp.float32) + mask_ref[...]   # (B*H, L, L)
    # No row-max subtraction: scores are O(1) (scale pre-folded) and the additive
    # -1e4 mask underflows cleanly in exp().  Assumes every query row has at least
    # one unmasked key (true for standard BERT padding masks).
    p = jnp.exp(s)
    p = p / jnp.sum(p, axis=-1, keepdims=True)              # exact divide; EUP is not a bottleneck
    ctx = jnp.einsum('nqk,nkd->nqd', p, vh,
                     preferred_element_type=jnp.float32)    # (B*H, L, HD_PAD)

    # (B*H, L, HD_PAD) -> (B*L, D_PAD) head-major padded layout matching w_out rows.
    rows = []
    for b in range(B):
        cb = ctx[b * NUM_HEADS:(b + 1) * NUM_HEADS]          # (H, L, HD_PAD)
        rows.append(jnp.swapaxes(cb, 0, 1).reshape(L, D_PAD))
    ctx2 = jnp.concatenate(rows, axis=0)                     # (B*L, D_PAD)

    # BertSelfOutput: dense + residual + LayerNorm.  Padded lanes of every term are 0.
    h = jnp.dot(ctx2, wo_ref[...], preferred_element_type=jnp.float32) + bo_ref[...] + x
    lane = lax.broadcasted_iota(jnp.int32, h.shape, 1)
    valid = (lane < HIDDEN).astype(jnp.float32)
    mean = jnp.sum(h, axis=-1, keepdims=True) * (1.0 / HIDDEN)
    c = (h - mean) * valid                                   # padded lanes stay exactly 0
    var = jnp.sum(c * c, axis=-1, keepdims=True) * (1.0 / HIDDEN)   # centered -> var >= 0
    out_ref[...] = c * lax.rsqrt(var + LN_EPS) * g_ref[...] + beta_ref[...]


# ------------------------------ kernel wrapper ---------------------------------
def run_bert_attention(x_pad, mask, pp):
    BL, Dp = x_pad.shape
    BH, L, _ = mask.shape

    flops = (2 * BL * HIDDEN * (3 * Dp)          # fused QKV projection
             + 4 * BH * L * L * HD_PAD           # scores + context
             + 2 * BL * Dp * Dp)                 # output projection
    transcendentals = BH * L * L + BL
    bytes_accessed = 4 * (2 * x_pad.size + mask.size
                          + sum(int(a.size) for a in pp.values()))

    def full(arr):
        return pl.BlockSpec(arr.shape, lambda i, _n=arr.ndim: (0,) * _n)

    return pl.pallas_call(
        bert_attention_kernel,
        out_shape=jax.ShapeDtypeStruct((BL, Dp), jnp.float32),
        grid=(1,),                                # batch folded into one grid step
        in_specs=[
            full(x_pad), full(mask),
            full(pp["w_qkv"]), full(pp["b_qkv"]),
            full(pp["w_out"]), full(pp["b_out"]),
            full(pp["ln_g"]), full(pp["ln_b"]),
        ],
        out_specs=pl.BlockSpec((BL, Dp), lambda i: (0, 0)),
        compiler_params=pltpu.CompilerParams(dimension_semantics=("arbitrary",)),
        cost_estimate=pl.CostEstimate(flops=flops,
                                      transcendentals=transcendentals,
                                      bytes_accessed=bytes_accessed),
    )(x_pad, mask, pp["w_qkv"], pp["b_qkv"], pp["w_out"], pp["b_out"],
      pp["ln_g"], pp["ln_b"])


# ------------------------------ host-side param prep ---------------------------
def prep_params(params):
    D, Dp, H, hd, hdp = HIDDEN, D_PAD, NUM_HEADS, HEAD_DIM, HD_PAD
    scale = 1.0 / math.sqrt(hd)                  # folded into Wq / bq

    # Fused QKV weight (contraction dim = true hidden): columns are head-major padded.
    w_qkv = jnp.zeros((D, 3 * Dp), jnp.float32)
    b_qkv = jnp.zeros((1, 3 * Dp), jnp.float32)
    srcs = [(params["wq"] * scale, params["bq"] * scale),
            (params["wk"], params["bk"]),
            (params["wv"], params["bv"])]
    for o, (w, b) in enumerate(srcs):
        for h in range(H):
            col = o * Dp + h * hdp
            w_qkv = w_qkv.at[:, col:col + hd].set(w[:, h * hd:(h + 1) * hd])
            b_qkv = b_qkv.at[0, col:col + hd].set(b[h * hd:(h + 1) * hd])

    # Output projection: rows follow the head-major padded ctx layout (row = h*hdp + d).
    w_out = jnp.zeros((Dp, Dp), jnp.float32)
    for h in range(H):
        w_out = w_out.at[h * hdp:h * hdp + hd, :D].set(params["wo"][h * hd:(h + 1) * hd, :])
    b_out = jnp.zeros((1, Dp), jnp.float32).at[0, :D].set(params["bo"])
    ln_g = jnp.zeros((1, Dp), jnp.float32).at[0, :D].set(params["ln_g"])
    ln_b = jnp.zeros((1, Dp), jnp.float32).at[0, :D].set(params["ln_b"])
    return dict(w_qkv=w_qkv, b_qkv=b_qkv, w_out=w_out, b_out=b_out,
                ln_g=ln_g, ln_b=ln_b)


def bert_attention_forward(params, hidden_states, attention_mask):
    """attention_mask: additive, shape (B, NUM_HEADS, L, L) per the PyTorch docstring."""
    B, L, D = hidden_states.shape
    x_pad = jnp.zeros((B * L, D_PAD), jnp.float32).at[:, :D].set(
        hidden_states.reshape(B * L, D))
    mask = attention_mask.astype(jnp.float32).reshape(B * NUM_HEADS, L, L)
    pp = prep_params(params)
    # TODO(synk): nn.Dropout (p>0 training path) and output_attentions=True are not emitted.
    out_pad = run_bert_attention(x_pad, mask, pp)
    return out_pad[:, :D].reshape(B, L, D)


# ------------------------------ pure-JAX reference -----------------------------
def reference_forward(params, hidden_states, attention_mask):
    B, L, D = hidden_states.shape
    q = hidden_states @ params["wq"] + params["bq"]
    k = hidden_states @ params["wk"] + params["bk"]
    v = hidden_states @ params["wv"] + params["bv"]
    split = lambda t: t.reshape(B, L, NUM_HEADS, HEAD_DIM).transpose(0, 2, 1, 3)
    qh, kh, vh = split(q), split(k), split(v)
    s = jnp.einsum('bhqd,bhkd->bhqk', qh, kh) / math.sqrt(HEAD_DIM) + attention_mask
    p = jax.nn.softmax(s, axis=-1)
    ctx = jnp.einsum('bhqk,bhkd->bhqd', p, vh).transpose(0, 2, 1, 3).reshape(B, L, D)
    h = ctx @ params["wo"] + params["bo"] + hidden_states
    mu = jnp.mean(h, axis=-1, keepdims=True)
    var = jnp.mean((h - mu) ** 2, axis=-1, keepdims=True)
    return (h - mu) / jnp.sqrt(var + LN_EPS) * params["ln_g"] + params["ln_b"]


# ------------------------------------ main --------------------------------------
if __name__ == "__main__":
    root = jax.random.PRNGKey(0)
    kx, kp = jax.random.split(root)
    ks = jax.random.split(kp, 10)

    def nrm(key, shape, scale=0.1):
        return scale * jax.random.normal(key, shape, dtype=jnp.float32)

    params = dict(
        wq=nrm(ks[0], (HIDDEN, HIDDEN)), bq=nrm(ks[1], (HIDDEN,)),
        wk=nrm(ks[2], (HIDDEN, HIDDEN)), bk=nrm(ks[3], (HIDDEN,)),
        wv=nrm(ks[4], (HIDDEN, HIDDEN)), bv=nrm(ks[5], (HIDDEN,)),
        wo=nrm(ks[6], (HIDDEN, HIDDEN)), bo=nrm(ks[7], (HIDDEN,)),
        ln_g=1.0 + nrm(ks[8], (HIDDEN,)), ln_b=nrm(ks[9], (HIDDEN,)),
    )

    hidden_states = 0.5 * jax.random.normal(kx, (BATCH, SEQ, HIDDEN), dtype=jnp.float32)

    # Additive attention mask (B, H, L, L): key positions >= seq_len get -10000.
    seq_lens = jnp.array([SEQ, SEQ - 2])
    key_valid = (jnp.arange(SEQ)[None, :] < seq_lens[:, None]).astype(jnp.float32)
    attention_mask = jnp.broadcast_to(
        ((1.0 - key_valid) * NEG_INF)[:, None, None, :],
        (BATCH, NUM_HEADS, SEQ, SEQ)).astype(jnp.float32)

    out = jax.jit(bert_attention_forward)(params, hidden_states, attention_mask)
    out = jax.block_until_ready(out)

    ref = jax.block_until_ready(reference_forward(params, hidden_states, attention_mask))

    err = float(jnp.max(jnp.abs(out - ref)))
    assert out.shape == (BATCH, SEQ, HIDDEN), out.shape
    assert err < 1e-4, f"Pallas vs reference mismatch: {err}"
    print("KERNEL_OK")
</pallas_src>

<mosaic_0001>
module attributes {stable_mosaic.version = 11 : i64} {
  func.func @bert_attention_kernel(%arg0: i32, %arg1: memref<16x128xf32, #tpu.memory_space<vmem>>, %arg2: memref<8x8x8xf32, #tpu.memory_space<vmem>>, %arg3: memref<32x384xf32, #tpu.memory_space<vmem>>, %arg4: memref<1x384xf32, #tpu.memory_space<vmem>>, %arg5: memref<128x128xf32, #tpu.memory_space<vmem>>, %arg6: memref<1x128xf32, #tpu.memory_space<vmem>>, %arg7: memref<1x128xf32, #tpu.memory_space<vmem>>, %arg8: memref<1x128xf32, #tpu.memory_space<vmem>>, %arg9: memref<16x128xf32, #tpu.memory_space<vmem>>) attributes {dimension_semantics = [#tpu.dimension_semantics<arbitrary>], iteration_bounds = array<i64: 1>, scalar_prefetch = 0 : i64, scratch_operands = 0 : i64, tpu.core_type = #tpu.core_type<tc>, window_params = [{pipeline_mode = #tpu.pipeline_mode<synchronous>, transform_indices = @transform_0, window_bounds = array<i64: 16, 128>}, {pipeline_mode = #tpu.pipeline_mode<synchronous>, transform_indices = @transform_1, window_bounds = array<i64: 8, 8, 8>}, {pipeline_mode = #tpu.pipeline_mode<synchronous>, transform_indices = @transform_2, window_bounds = array<i64: 32, 384>}, {pipeline_mode = #tpu.pipeline_mode<synchronous>, transform_indices = @transform_3, window_bounds = array<i64: 1, 384>}, {pipeline_mode = #tpu.pipeline_mode<synchronous>, transform_indices = @transform_4, window_bounds = array<i64: 128, 128>}, {pipeline_mode = #tpu.pipeline_mode<synchronous>, transform_indices = @transform_5, window_bounds = array<i64: 1, 128>}, {pipeline_mode = #tpu.pipeline_mode<synchronous>, transform_indices = @transform_6, window_bounds = array<i64: 1, 128>}, {pipeline_mode = #tpu.pipeline_mode<synchronous>, transform_indices = @transform_7, window_bounds = array<i64: 1, 128>}, {pipeline_mode = #tpu.pipeline_mode<synchronous>, transform_indices = @transform_8, window_bounds = array<i64: 16, 128>}]} {
    %c0 = arith.constant 0 : index
    %c0_0 = arith.constant 0 : index
    %0 = vector.load %arg1[%c0, %c0_0] : memref<16x128xf32, #tpu.memory_space<vmem>>, vector<16x128xf32>
    %1 = vector.extract_strided_slice %0 {offsets = [0, 0], sizes = [16, 32], strides = [1, 1]} : vector<16x128xf32> to vector<16x32xf32>
    %c0_1 = arith.constant 0 : index
    %c0_2 = arith.constant 0 : index
    %2 = vector.load %arg3[%c0_1, %c0_2] : memref<32x384xf32, #tpu.memory_space<vmem>>, vector<32x384xf32>
    %cst = arith.constant dense<0.000000e+00> : vector<16x384xf32>
    %3 = tpu.matmul %1, %2, %cst {dimension_numbers = #tpu.dot_dimension_numbers<[1], [0], [0], [1], [0, 0, 1, 1], [], []>} : vector<16x32xf32>, vector<32x384xf32>, vector<16x384xf32> -> vector<16x384xf32>
    %c0_3 = arith.constant 0 : index
    %c0_4 = arith.constant 0 : index
    %4 = vector.load %arg4[%c0_3, %c0_4] : memref<1x384xf32, #tpu.memory_space<vmem>>, vector<1x384xf32>
    %5 = vector.broadcast %4 : vector<1x384xf32> to vector<16x384xf32>
    %6 = arith.addf %3, %5 : vector<16x384xf32>
    %7 = vector.extract_strided_slice %6 {offsets = [0, 0], sizes = [16, 128], strides = [1, 1]} : vector<16x384xf32> to vector<16x128xf32>
    %8 = vector.extract_strided_slice %6 {offsets = [0, 128], sizes = [16, 128], strides = [1, 1]} : vector<16x384xf32> to vector<16x128xf32>
    %9 = vector.extract_strided_slice %6 {offsets = [0, 256], sizes = [16, 128], strides = [1, 1]} : vector<16x384xf32> to vector<16x128xf32>
    %10 = vector.extract_strided_slice %7 {offsets = [0, 0], sizes = [8, 128], strides = [1, 1]} : vector<16x128xf32> to vector<8x128xf32>
    %11 = vector.shape_cast %10 : vector<8x128xf32> to vector<8x4x32xf32>
    %12 = tpu.transpose %11, [1, 0, 2] : vector<8x4x32xf32> -> vector<4x8x32xf32>
    %13 = vector.extract_strided_slice %7 {offsets = [8, 0], sizes = [8, 128], strides = [1, 1]} : vector<16x128xf32> to vector<8x128xf32>
    %14 = vector.shape_cast %13 : vector<8x128xf32> to vector<8x4x32xf32>
    %15 = tpu.transpose %14, [1, 0, 2] : vector<8x4x32xf32> -> vector<4x8x32xf32>
    %16 = tpu.concatenate %12, %15 in 0 : vector<4x8x32xf32>, vector<4x8x32xf32> -> vector<8x8x32xf32>
    %17 = vector.extract_strided_slice %8 {offsets = [0, 0], sizes = [8, 128], strides = [1, 1]} : vector<16x128xf32> to vector<8x128xf32>
    %18 = vector.shape_cast %17 : vector<8x128xf32> to vector<8x4x32xf32>
    %19 = tpu.transpose %18, [1, 0, 2] : vector<8x4x32xf32> -> vector<4x8x32xf32>
    %20 = vector.extract_strided_slice %8 {offsets = [8, 0], sizes = [8, 128], strides = [1, 1]} : vector<16x128xf32> to vector<8x128xf32>
    %21 = vector.shape_cast %20 : vector<8x128xf32> to vector<8x4x32xf32>
    %22 = tpu.transpose %21, [1, 0, 2] : vector<8x4x32xf32> -> vector<4x8x32xf32>
    %23 = tpu.concatenate %19, %22 in 0 : vector<4x8x32xf32>, vector<4x8x32xf32> -> vector<8x8x32xf32>
    %24 = vector.extract_strided_slice %9 {offsets = [0, 0], sizes = [8, 128], strides = [1, 1]} : vector<16x128xf32> to vector<8x128xf32>
    %25 = vector.shape_cast %24 : vector<8x128xf32> to vector<8x4x32xf32>
    %26 = tpu.transpose %25, [1, 0, 2] : vector<8x4x32xf32> -> vector<4x8x32xf32>
    %27 = vector.extract_strided_slice %9 {offsets = [8, 0], sizes = [8, 128], strides = [1, 1]} : vector<16x128xf32> to vector<8x128xf32>
    %28 = vector.shape_cast %27 : vector<8x128xf32> to vector<8x4x32xf32>
    %29 = tpu.transpose %28, [1, 0, 2] : vector<8x4x32xf32> -> vector<4x8x32xf32>
    %30 = tpu.concatenate %26, %29 in 0 : vector<4x8x32xf32>, vector<4x8x32xf32> -> vector<8x8x32xf32>
    "tpu.trace_start"() <{level = 10 : i32, message = "nqd,nkd->nqk"}> : () -> ()
    %cst_5 = arith.constant dense<0.000000e+00> : vector<8x8x8xf32>
    %31 = tpu.matmul %16, %23, %cst_5 {dimension_numbers = #tpu.dot_dimension_numbers<[2], [2], [1], [1], [0, 0, 0, 1, 1, 1], [0], [0]>} : vector<8x8x32xf32>, vector<8x8x32xf32>, vector<8x8x8xf32> -> vector<8x8x8xf32>
    "tpu.trace_stop"() : () -> ()
    %c0_6 = arith.constant 0 : index
    %c0_7 = arith.constant 0 : index
    %c0_8 = arith.constant 0 : index
    %32 = vector.load %arg2[%c0_6, %c0_7, %c0_8] : memref<8x8x8xf32, #tpu.memory_space<vmem>>, vector<8x8x8xf32>
    %33 = arith.addf %31, %32 : vector<8x8x8xf32>
    %34 = math.exp %33 : vector<8x8x8xf32>
    %cst_9 = arith.constant dense<0.000000e+00> : vector<8x8xf32>
    %35 = vector.multi_reduction <add>, %34, %cst_9 [2] : vector<8x8x8xf32> to vector<8x8xf32>
    %36 = vector.shape_cast %35 : vector<8x8xf32> to vector<8x8x1xf32>
    %37 = vector.broadcast %36 : vector<8x8x1xf32> to vector<8x8x8xf32>
    %38 = arith.divf %34, %37 : vector<8x8x8xf32>
    "tpu.trace_start"() <{level = 10 : i32, message = "nqk,nkd->nqd"}> : () -> ()
    %cst_10 = arith.constant dense<0.000000e+00> : vector<8x8x32xf32>
    %39 = tpu.matmul %38, %30, %cst_10 {dimension_numbers = #tpu.dot_dimension_numbers<[2], [1], [1], [2], [0, 0, 0, 1, 1, 2], [0], [0]>} : vector<8x8x8xf32>, vector<8x8x32xf32>, vector<8x8x32xf32> -> vector<8x8x32xf32>
    "tpu.trace_stop"() : () -> ()
    %40 = vector.extract_strided_slice %39 {offsets = [0, 0, 0], sizes = [4, 8, 32], strides = [1, 1, 1]} : vector<8x8x32xf32> to vector<4x8x32xf32>
    %41 = tpu.transpose %40, [1, 0, 2] : vector<4x8x32xf32> -> vector<8x4x32xf32>
    %42 = vector.shape_cast %41 : vector<8x4x32xf32> to vector<8x128xf32>
    %43 = vector.extract_strided_slice %39 {offsets = [4, 0, 0], sizes = [4, 8, 32], strides = [1, 1, 1]} : vector<8x8x32xf32> to vector<4x8x32xf32>
    %44 = tpu.transpose %43, [1, 0, 2] : vector<4x8x32xf32> -> vector<8x4x32xf32>
    %45 = vector.shape_cast %44 : vector<8x4x32xf32> to vector<8x128xf32>
    %46 = tpu.concatenate %42, %45 in 0 : vector<8x128xf32>, vector<8x128xf32> -> vector<16x128xf32>
    %c0_11 = arith.constant 0 : index
    %c0_12 = arith.constant 0 : index
    %47 = vector.load %arg5[%c0_11, %c0_12] : memref<128x128xf32, #tpu.memory_space<vmem>>, vector<128x128xf32>
    %cst_13 = arith.constant dense<0.000000e+00> : vector<16x128xf32>
    %48 = tpu.matmul %46, %47, %cst_13 {dimension_numbers = #tpu.dot_dimension_numbers<[1], [0], [0], [1], [0, 0, 1, 1], [], []>} : vector<16x128xf32>, vector<128x128xf32>, vector<16x128xf32> -> vector<16x128xf32>
    %c0_14 = arith.constant 0 : index
    %c0_15 = arith.constant 0 : index
    %49 = vector.load %arg6[%c0_14, %c0_15] : memref<1x128xf32, #tpu.memory_space<vmem>>, vector<1x128xf32>
    %50 = vector.broadcast %49 : vector<1x128xf32> to vector<16x128xf32>
    %51 = arith.addf %48, %50 : vector<16x128xf32>
    %52 = arith.addf %51, %0 : vector<16x128xf32>
    %53 = tpu.iota {dimensions = array<i32: 1>} : vector<16x128xi32>
    %c32_i32 = arith.constant 32 : i32
    %54 = vector.broadcast %c32_i32 : i32 to vector<16x128xi32>
    %55 = arith.cmpi slt, %53, %54 : vector<16x128xi32>
    %56 = arith.extui %55 : vector<16x128xi1> to vector<16x128xi32>
    %57 = arith.sitofp %56 : vector<16x128xi32> to vector<16x128xf32>
    %cst_16 = arith.constant dense<0.000000e+00> : vector<16xf32>
    %58 = vector.multi_reduction <add>, %52, %cst_16 [1] : vector<16x128xf32> to vector<16xf32>
    %59 = vector.shape_cast %58 : vector<16xf32> to vector<16x1xf32>
    %cst_17 = arith.constant 3.125000e-02 : f32
    %60 = vector.broadcast %cst_17 : f32 to vector<16x1xf32>
    %61 = arith.mulf %59, %60 : vector<16x1xf32>
    %62 = vector.broadcast %61 : vector<16x1xf32> to vector<16x128xf32>
    %63 = arith.subf %52, %62 : vector<16x128xf32>
    %64 = arith.mulf %63, %57 : vector<16x128xf32>
    %65 = arith.mulf %64, %64 : vector<16x128xf32>
    %cst_18 = arith.constant dense<0.000000e+00> : vector<16xf32>
    %66 = vector.multi_reduction <add>, %65, %cst_18 [1] : vector<16x128xf32> to vector<16xf32>
    %67 = vector.shape_cast %66 : vector<16xf32> to vector<16x1xf32>
    %cst_19 = arith.constant 3.125000e-02 : f32
    %68 = vector.broadcast %cst_19 : f32 to vector<16x1xf32>
    %69 = arith.mulf %67, %68 : vector<16x1xf32>
    %cst_20 = arith.constant 9.99999996E-13 : f32
    %70 = vector.broadcast %cst_20 : f32 to vector<16x1xf32>
    %71 = arith.addf %69, %70 : vector<16x1xf32>
    %72 = math.rsqrt %71 : vector<16x1xf32>
    %73 = vector.broadcast %72 : vector<16x1xf32> to vector<16x128xf32>
    %74 = arith.mulf %64, %73 : vector<16x128xf32>
    %c0_21 = arith.constant 0 : index
    %c0_22 = arith.constant 0 : index
    %75 = vector.load %arg7[%c0_21, %c0_22] : memref<1x128xf32, #tpu.memory_space<vmem>>, vector<1x128xf32>
    %76 = vector.broadcast %75 : vector<1x128xf32> to vector<16x128xf32>
    %77 = arith.mulf %74, %76 : vector<16x128xf32>
    %c0_23 = arith.constant 0 : index
    %c0_24 = arith.constant 0 : index
    %78 = vector.load %arg8[%c0_23, %c0_24] : memref<1x128xf32, #tpu.memory_space<vmem>>, vector<1x128xf32>
    %79 = vector.broadcast %78 : vector<1x128xf32> to vector<16x128xf32>
    %80 = arith.addf %77, %79 : vector<16x128xf32>
    %c0_25 = arith.constant 0 : index
    %c0_26 = arith.constant 0 : index
    %81 = vector.load %arg9[%c0_25, %c0_26] : memref<16x128xf32, #tpu.memory_space<vmem>>, vector<16x128xf32>
    tpu.vector_store %arg9[%c0_25, %c0_26], %80 {strides = array<i32>} : memref<16x128xf32, #tpu.memory_space<vmem>>, vector<16x128xf32>,
    return
  }
  func.func @transform_0(%arg0: i32) -> (i32, i32) {
    %c0_i32 = arith.constant 0 : i32
    %c0_i32_0 = arith.constant 0 : i32
    %c0_i32_1 = arith.constant 0 : i32
    return %c0_i32, %c0_i32_0 : i32, i32
  }
  func.func @transform_1(%arg0: i32) -> (i32, i32, i32) {
    %c0_i32 = arith.constant 0 : i32
    %c0_i32_0 = arith.constant 0 : i32
    %c0_i32_1 = arith.constant 0 : i32
    %c0_i32_2 = arith.constant 0 : i32
    return %c0_i32, %c0_i32_0, %c0_i32_1 : i32, i32, i32
  }
  func.func @transform_2(%arg0: i32) -> (i32, i32) {
    %c0_i32 = arith.constant 0 : i32
    %c0_i32_0 = arith.constant 0 : i32
    %c0_i32_1 = arith.constant 0 : i32
    return %c0_i32, %c0_i32_0 : i32, i32
  }
  func.func @transform_3(%arg0: i32) -> (i32, i32) {
    %c0_i32 = arith.constant 0 : i32
    %c0_i32_0 = arith.constant 0 : i32
    %c0_i32_1 = arith.constant 0 : i32
    return %c0_i32, %c0_i32_0 : i32, i32
  }
  func.func @transform_4(%arg0: i32) -> (i32, i32) {
    %c0_i32 = arith.constant 0 : i32
    %c0_i32_0 = arith.constant 0 : i32
    %c0_i32_1 = arith.constant 0 : i32
    return %c0_i32, %c0_i32_0 : i32, i32
  }
  func.func @transform_5(%arg0: i32) -> (i32, i32) {
    %c0_i32 = arith.constant 0 : i32
    %c0_i32_0 = arith.constant 0 : i32
    %c0_i32_1 = arith.constant 0 : i32
    return %c0_i32, %c0_i32_0 : i32, i32
  }
  func.func @transform_6(%arg0: i32) -> (i32, i32) {
    %c0_i32 = arith.constant 0 : i32
    %c0_i32_0 = arith.constant 0 : i32
    %c0_i32_1 = arith.constant 0 : i32
    return %c0_i32, %c0_i32_0 : i32, i32
  }
  func.func @transform_7(%arg0: i32) -> (i32, i32) {
    %c0_i32 = arith.constant 0 : i32
    %c0_i32_0 = arith.constant 0 : i32
    %c0_i32_1 = arith.constant 0 : i32
    return %c0_i32, %c0_i32_0 : i32, i32
  }
  func.func @transform_8(%arg0: i32) -> (i32, i32) {
    %c0_i32 = arith.constant 0 : i32
    %c0_i32_0 = arith.constant 0 : i32
    %c0_i32_1 = arith.constant 0 : i32
    return %c0_i32, %c0_i32_0 : i32, i32
  }
}

</mosaic_0001>

<llo_original>
// kernel: bert_attention_forward.1
$region0: #{bert_attention_forward.1}
  #allocation0 [shape = 'u32[]', space=smem, size = 0x4, offset = 0x4, fixed_abs, tag = 'smem constant byte address 0x4 - core index']
  #allocation1 [shape = 'u32[144,128]{1,0:T(1,128)}', space=vmem, size = 0x12000, scoped, tag = 'internal scratch']
  %s0 = inlined_call_operand.vmem [shape: f32[16,128], index: 0, kind: input, shape index: {}]
  %s1 = inlined_call_operand.vmem [shape: f32[8,8,8], index: 1, kind: input, shape index: {}]
  %s2 = inlined_call_operand.vmem [shape: f32[32,384], index: 2, kind: input, shape index: {}]
  %s3 = inlined_call_operand.vmem [shape: f32[1,384], index: 3, kind: input, shape index: {}]
  %s4 = inlined_call_operand.vmem [shape: f32[128,128], index: 4, kind: input, shape index: {}]
  %s5 = inlined_call_operand.vmem [shape: f32[1,128], index: 5, kind: input, shape index: {}]
  %s6 = inlined_call_operand.vmem [shape: f32[1,128], index: 6, kind: input, shape index: {}]
  %s7 = inlined_call_operand.vmem [shape: f32[1,128], index: 7, kind: input, shape index: {}]
  %s8 = inlined_call_operand.vmem [shape: f32[16,128], index: 8, kind: output, shape index: {}]
  %s9 = sld [smem:[#allocation0]]
  $region42: #{bert_attention_forward.1} parent=0
    _
  %s11 = ssub.s32 1, %s9
  %s12 = scalar_select 0, %s11, %s9
  // Predicated region
  $region2: #{bert_attention_forward.1} parent=0 // pred_check
    _
  $region3: #{bert_attention_forward.1} parent=0 // pred_check_branch
    %14 = sbr.rel (0) target = $region5
  $region4: #{bert_attention_forward.1} parent=0 // pred_region
    _
  $region5: #{bert_attention_forward.1} parent=0 // pred_fallthru
    _
  // Predicated region
  $region6: #{bert_attention_forward.1} parent=0 // pred_check
    _
  $region7: #{bert_attention_forward.1} parent=0 // pred_check_branch
    %16 = sbr.rel (0) target = $region9
  $region8: #{bert_attention_forward.1} parent=0 // pred_region
    _
  $region9: #{bert_attention_forward.1} parent=0 // pred_fallthru
    _
  // Predicated region
  $region10: #{bert_attention_forward.1} parent=0 // pred_check
    _
  $region11: #{bert_attention_forward.1} parent=0 // pred_check_branch
    %18 = sbr.rel (0) target = $region13
  $region12: #{bert_attention_forward.1} parent=0 // pred_region
    _
  $region13: #{bert_attention_forward.1} parent=0 // pred_fallthru
    _
  // Predicated region
  $region14: #{bert_attention_forward.1} parent=0 // pred_check
    _
  $region15: #{bert_attention_forward.1} parent=0 // pred_check_branch
    %20 = sbr.rel (0) target = $region17
  $region16: #{bert_attention_forward.1} parent=0 // pred_region
    _
  $region17: #{bert_attention_forward.1} parent=0 // pred_fallthru
    _
  // Predicated region
  $region18: #{bert_attention_forward.1} parent=0 // pred_check
    _
  $region19: #{bert_attention_forward.1} parent=0 // pred_check_branch
    %22 = sbr.rel (0) target = $region21
  $region20: #{bert_attention_forward.1} parent=0 // pred_region
    _
  $region21: #{bert_attention_forward.1} parent=0 // pred_fallthru
    _
  // Predicated region
  $region22: #{bert_attention_forward.1} parent=0 // pred_check
    _
  $region23: #{bert_attention_forward.1} parent=0 // pred_check_branch
    %24 = sbr.rel (0) target = $region25
  $region24: #{bert_attention_forward.1} parent=0 // pred_region
    _
  $region25: #{bert_attention_forward.1} parent=0 // pred_fallthru
    _
  // Predicated region
  $region26: #{bert_attention_forward.1} parent=0 // pred_check
    _
  $region27: #{bert_attention_forward.1} parent=0 // pred_check_branch
    %26 = sbr.rel (0) target = $region29
  $region28: #{bert_attention_forward.1} parent=0 // pred_region
    _
  $region29: #{bert_attention_forward.1} parent=0 // pred_fallthru
    _
  // Predicated region
  $region30: #{bert_attention_forward.1} parent=0 // pred_check
    _
  $region31: #{bert_attention_forward.1} parent=0 // pred_check_branch
    %28 = sbr.rel (0) target = $region33
  $region32: #{bert_attention_forward.1} parent=0 // pred_region
    _
  $region33: #{bert_attention_forward.1} parent=0 // pred_fallthru
    _
  %v29 = vld [vmem:[%s0] sm:$0xff]
  %v30 = vld [vmem:[%s0 + $0x8] sm:$0xff]
  %v31 = vld [vmem:[%s2] sm:$0xff]
  %v32 = vld [vmem:[%s2 + $0x8] sm:$0xff]
  %v33 = vld [vmem:[%s2 + $0x10] sm:$0xff]
  %v34 = vld [vmem:[%s2 + $0x18] sm:$0xff]
  %v35 = vld [vmem:[%s2 + $0x20] sm:$0xff]
  %v36 = vld [vmem:[%s2 + $0x28] sm:$0xff]
  %v37 = vld [vmem:[%s2 + $0x30] sm:$0xff]
  %v38 = vld [vmem:[%s2 + $0x38] sm:$0xff]
  %v39 = vld [vmem:[%s2 + $0x40] sm:$0xff]
  %v40 = vld [vmem:[%s2 + $0x48] sm:$0xff]
  %v41 = vld [vmem:[%s2 + $0x50] sm:$0xff]
  %v42 = vld [vmem:[%s2 + $0x58] sm:$0xff]
  %v43 = vld [vmem:[%s3] sm:$0x7]
  %v45 = vlaneseq
  %v46 = vshrl.u32 %v45, 7
  %v47 = vsub.s32 0, %v46
  %v48 = vrot.slane %v43, %v47
  %v49 = vlaneseq
  %v50 = vshrl.u32 %v49, 7
  %v51 = vsub.s32 1, %v50
  %v52 = vrot.slane %v43, %v51
  %v53 = vlaneseq
  %v54 = vshrl.u32 %v53, 7
  %v55 = vsub.s32 2, %v54
  %v56 = vrot.slane %v43, %v55
  %vm60 = vcmask 261120
  %v62 = vsel %vm60, %v29, 0
  %v65 = vsel %vm60, %v30, 0
  %67 = vmatprep.subr.mxu0 %v32
  %68 = vmatpush1.msra.mxu0 %v31
  %69 = vmatprep.subr.mxu0 %v35
  %70 = vmatpush1.msra.mxu0 %v34
  %71 = vmatprep.subr.mxu0 %v38
  %72 = vmatpush1.msra.mxu0 %v37
  %73 = vmatprep.subr.mxu0 %v41
  %74 = vmatpush1.msra.mxu0 %v40
  %75 = vmatprep.subr.mxu0 0.0
  %76 = vmatpush1.msra.mxu0 0.0
  %77 = vmatprep.subr.mxu0 0.0
  %78 = vmatpush1.msra.mxu0 0.0
  %79 = vmatprep.subr.mxu0 0.0
  %80 = vmatpush1.msra.mxu0 0.0
  %81 = vmatprep.subr.mxu0 0.0
  %82 = vmatpush1.msra.mxu0 0.0
  %83 = vmatprep.subr.mxu0 0.0
  %84 = vmatpush1.msra.mxu0 0.0
  %85 = vmatprep.subr.mxu0 0.0
  %86 = vmatpush1.msra.mxu0 0.0
  %87 = vmatprep.subr.mxu0 0.0
  %88 = vmatpush1.msra.mxu0 0.0
  %89 = vmatprep.subr.mxu0 0.0
  %90 = vmatpush1.msra.mxu0 0.0
  %91 = vmatprep.subr.mxu0 0.0
  %92 = vmatpush1.msra.mxu0 0.0
  %93 = vmatprep.subr.mxu0 0.0
  %94 = vmatpush1.msra.mxu0 0.0
  %95 = vmatprep.subr.mxu0 0.0
  %96 = vmatpush1.msra.mxu0 0.0
  %97 = vmatprep.subr.mxu0 0.0
  %98 = vmatpush1.msra.mxu0 0.0
  %99 = vmatprep.subr.mxu0 0.0
  %100 = vmatpush1.msra.mxu0 0.0
  %101 = vmatprep.subr.mxu0 0.0
  %102 = vmatpush1.msra.mxu0 0.0
  %103 = vmatprep.subr.mxu0 0.0
  %104 = vmatpush1.msra.mxu0 0.0
  %105 = vmatprep.subr.mxu0 0.0
  %106 = vmatpush1.msra.mxu0 0.0
  %107 = vmatprep.subr.mxu0 0.0
  %108 = vmatpush1.msra.mxu0 0.0
  %109 = vmatprep.subr.mxu0 0.0
  %110 = vmatpush1.msra.mxu0 0.0
  %111 = vmatprep.subr.mxu0 0.0
  %112 = vmatpush1.msra.mxu0 0.0
  %113 = vmatprep.subr.mxu0 0.0
  %114 = vmatpush1.msra.mxu0 0.0
  %115 = vmatprep.subr.mxu0 0.0
  %116 = vmatpush1.msra.mxu0 0.0
  %117 = vmatprep.subr.mxu0 0.0
  %118 = vmatpush1.msra.mxu0 0.0
  %119 = vmatprep.subr.mxu0 0.0
  %120 = vmatpush1.msra.mxu0 0.0
  %121 = vmatprep.subr.mxu0 0.0
  %122 = vmatpush1.msra.mxu0 0.0
  %123 = vmatprep.subr.mxu0 0.0
  %124 = vmatpush1.msra.mxu0 0.0
  %125 = vmatprep.subr.mxu0 0.0
  %126 = vmatpush1.msra.mxu0 0.0
  %127 = vmatprep.subr.mxu0 0.0
  %128 = vmatpush1.msra.mxu0 0.0
  %129 = vmatprep.subr.mxu0 0.0
  %130 = vmatpush1.msra.mxu0 0.0
  %131 = vmatprep.mubr.f32.mxu0 0.0
  %132 = vmatmul.mubr.f32.gmra.mrb[0].mxu0 %v62
  %v133 = vpop.f32.mrb[0].mxu0
  %v134 = vadd.f32 %v48, %v133
  %v135 = vpop.f32.mrb[0].mxu0
  %v136 = vadd.f32 %v52, %v135
  %137 = vmatprep.mubr.f32.mxu0 0.0
  %138 = vmatmul.mubr.f32.gmra.mrb[0].mxu0 %v65
  %v139 = vpop.f32.mrb[0].mxu0
  %v140 = vadd.f32 %v48, %v139
  %v141 = vpop.f32.mrb[0].mxu0
  %v142 = vadd.f32 %v52, %v141
  %143 = vdwg.mxu0
  %144 = vmatprep.subr.mxu0 0.0
  %145 = vmatpush1.msra.mxu0 %v33
  %146 = vmatprep.subr.mxu0 0.0
  %147 = vmatpush1.msra.mxu0 %v36
  %148 = vmatprep.subr.mxu0 0.0
  %149 = vmatpush1.msra.mxu0 %v39
  %150 = vmatprep.subr.mxu0 0.0
  %151 = vmatpush1.msra.mxu0 %v42
  %152 = vmatprep.subr.mxu0 0.0
  %153 = vmatpush1.msra.mxu0 0.0
  %154 = vmatprep.subr.mxu0 0.0
  %155 = vmatpush1.msra.mxu0 0.0
  %156 = vmatprep.subr.mxu0 0.0
  %157 = vmatpush1.msra.mxu0 0.0
  %158 = vmatprep.subr.mxu0 0.0
  %159 = vmatpush1.msra.mxu0 0.0
  %160 = vmatprep.subr.mxu0 0.0
  %161 = vmatpush1.msra.mxu0 0.0
  %162 = vmatprep.subr.mxu0 0.0
  %163 = vmatpush1.msra.mxu0 0.0
  %164 = vmatprep.subr.mxu0 0.0
  %165 = vmatpush1.msra.mxu0 0.0
  %166 = vmatprep.subr.mxu0 0.0
  %167 = vmatpush1.msra.mxu0 0.0
  %168 = vmatprep.subr.mxu0 0.0
  %169 = vmatpush1.msra.mxu0 0.0
  %170 = vmatprep.subr.mxu0 0.0
  %171 = vmatpush1.msra.mxu0 0.0
  %172 = vmatprep.subr.mxu0 0.0
  %173 = vmatpush1.msra.mxu0 0.0
  %174 = vmatprep.subr.mxu0 0.0
  %175 = vmatpush1.msra.mxu0 0.0
  %176 = vmatprep.subr.mxu0 0.0
  %177 = vmatpush1.msra.mxu0 0.0
  %178 = vmatprep.subr.mxu0 0.0
  %179 = vmatpush1.msra.mxu0 0.0
  %180 = vmatprep.subr.mxu0 0.0
  %181 = vmatpush1.msra.mxu0 0.0
  %182 = vmatprep.subr.mxu0 0.0
  %183 = vmatpush1.msra.mxu0 0.0
  %184 = vmatprep.subr.mxu0 0.0
  %185 = vmatpush1.msra.mxu0 0.0
  %186 = vmatprep.subr.mxu0 0.0
  %187 = vmatpush1.msra.mxu0 0.0
  %188 = vmatprep.subr.mxu0 0.0
  %189 = vmatpush1.msra.mxu0 0.0
  %190 = vmatprep.subr.mxu0 0.0
  %191 = vmatpush1.msra.mxu0 0.0
  %192 = vmatprep.subr.mxu0 0.0
  %193 = vmatpush1.msra.mxu0 0.0
  %194 = vmatprep.subr.mxu0 0.0
  %195 = vmatpush1.msra.mxu0 0.0
  %196 = vmatprep.subr.mxu0 0.0
  %197 = vmatpush1.msra.mxu0 0.0
  %198 = vmatprep.subr.mxu0 0.0
  %199 = vmatpush1.msra.mxu0 0.0
  %200 = vmatprep.subr.mxu0 0.0
  %201 = vmatpush1.msra.mxu0 0.0
  %202 = vmatprep.subr.mxu0 0.0
  %203 = vmatpush1.msra.mxu0 0.0
  %204 = vmatprep.subr.mxu0 0.0
  %205 = vmatpush1.msra.mxu0 0.0
  %206 = vmatprep.subr.mxu0 0.0
  %207 = vmatpush1.msra.mxu0 0.0
  %208 = vmatprep.mubr.f32.mxu0 0.0
  %209 = vmatmul.mubr.f32.gmra.mrb[0].mxu0 %v62
  %v210 = vpop.f32.mrb[0].mxu0
  %v211 = vadd.f32 %v56, %v210
  %v212 = vpop.f32.mrb[0].mxu0
  %213 = vmatprep.mubr.f32.mxu0 0.0
  %214 = vmatmul.mubr.f32.gmra.mrb[0].mxu0 %v65
  %v215 = vpop.f32.mrb[0].mxu0
  %v216 = vadd.f32 %v56, %v215
  %v217 = vpop.f32.mrb[0].mxu0
  %218 = vdwg.mxu0
  %220 = vrot.lane.b32.xlu0 %v134, 96
  %v221 = vpop.permute.xlu0 %220
  %223 = vrot.lane.b32.xlu0 %v134, 64
  %v224 = vpop.permute.xlu0 %223
  %226 = vrot.lane.b32.xlu0 %v134, 32
  %v227 = vpop.permute.xlu0 %226
  %v229 = vcombine.low %v134, %v224
  %v230 = vcombine.high %v134, %v224
  %v232 = vunpack.c.l.s4 1983009808
  %v233 = vunpack.c.0.s8 %v232
  %v234 = vlaneseq
  %v235 = vshrl.u32 %v234, 7
  %v236 = vsub.s32 %v233, %v235
  %v237 = vrot.slane %v229, %v236
  %v239 = vunpack.c.l.s4 1983009808
  %v240 = vunpack.c.0.s8 %v239
  %v241 = vlaneseq
  %v242 = vshrl.u32 %v241, 7
  %v243 = vsub.s32 %v240, %v242
  %v244 = vrot.slane %v230, %v243
  %v245 = vcombine.low %v221, %v227
  %v246 = vcombine.high %v221, %v227
  %v248 = vunpack.c.l.s4 1983009808
  %v249 = vunpack.c.0.s8 %v248
  %v250 = vlaneseq
  %v251 = vshrl.u32 %v250, 7
  %v252 = vsub.s32 %v249, %v251
  %v253 = vrot.slane %v245, %v252
  %v255 = vunpack.c.l.s4 1983009808
  %v256 = vunpack.c.0.s8 %v255
  %v257 = vlaneseq
  %v258 = vshrl.u32 %v257, 7
  %v259 = vsub.s32 %v256, %v258
  %v260 = vrot.slane %v246, %v259
  %v261 = vcombine.low %v237, %v253
  %v262 = vcombine.high %v237, %v253
  %v264 = vunpack.c.l.s4 1934713408
  %v265 = vunpack.c.0.s8 %v264
  %v266 = vlaneseq
  %v267 = vshrl.u32 %v266, 7
  %v268 = vsub.s32 %v265, %v267
  %v269 = vrot.slane %v261, %v268
  %v271 = vunpack.c.l.s4 1934713408
  %v272 = vunpack.c.0.s8 %v271
  %v273 = vlaneseq
  %v274 = vshrl.u32 %v273, 7
  %v275 = vsub.s32 %v272, %v274
  %v276 = vrot.slane %v262, %v275
  %v277 = vcombine.low %v244, %v260
  %v278 = vcombine.high %v244, %v260
  %v280 = vunpack.c.l.s4 1934713408
  %v281 = vunpack.c.0.s8 %v280
  %v282 = vlaneseq
  %v283 = vshrl.u32 %v282, 7
  %v284 = vsub.s32 %v281, %v283
  %v285 = vrot.slane %v277, %v284
  %v287 = vunpack.c.l.s4 1934713408
  %v288 = vunpack.c.0.s8 %v287
  %v289 = vlaneseq
  %v290 = vshrl.u32 %v289, 7
  %v291 = vsub.s32 %v288, %v290
  %v292 = vrot.slane %v278, %v291
  %v293 = vcombine.high %v269, 0.0
  %v294 = vcombine.high %v276, 0.0
  %v295 = vcombine.high %v285, 0.0
  %v296 = vcombine.high %v292, 0.0
  %v297 = vcombine.low %v269, %v276
  %v299 = vunpack.c.l.s4 1983009808
  %v300 = vunpack.c.0.s8 %v299
  %v301 = vlaneseq
  %v302 = vshrl.u32 %v301, 7
  %v303 = vsub.s32 %v300, %v302
  %v304 = vrot.slane %v297, %v303
  %v305 = vcombine.low %v293, %v294
  %v307 = vunpack.c.l.s4 1983009808
  %v308 = vunpack.c.0.s8 %v307
  %v309 = vlaneseq
  %v310 = vshrl.u32 %v309, 7
  %v311 = vsub.s32 %v308, %v310
  %v312 = vrot.slane %v305, %v311
  %v313 = vcombine.low %v285, %v292
  %v315 = vunpack.c.l.s4 1983009808
  %v316 = vunpack.c.0.s8 %v315
  %v317 = vlaneseq
  %v318 = vshrl.u32 %v317, 7
  %v319 = vsub.s32 %v316, %v318
  %v320 = vrot.slane %v313, %v319
  %v321 = vcombine.low %v295, %v296
  %v323 = vunpack.c.l.s4 1983009808
  %v324 = vunpack.c.0.s8 %v323
  %v325 = vlaneseq
  %v326 = vshrl.u32 %v325, 7
  %v327 = vsub.s32 %v324, %v326
  %v328 = vrot.slane %v321, %v327
  %v329 = vcombine.low %v304, %v312
  %v330 = vcombine.high %v304, %v312
  %v332 = vunpack.c.l.s4 1934713408
  %v333 = vunpack.c.0.s8 %v332
  %v334 = vlaneseq
  %v335 = vshrl.u32 %v334, 7
  %v336 = vsub.s32 %v333, %v335
  %v337 = vrot.slane %v329, %v336
  %v339 = vunpack.c.l.s4 1934713408
  %v340 = vunpack.c.0.s8 %v339
  %v341 = vlaneseq
  %v342 = vshrl.u32 %v341, 7
  %v343 = vsub.s32 %v340, %v342
  %v344 = vrot.slane %v330, %v343
  %v345 = vcombine.low %v320, %v328
  %v346 = vcombine.high %v320, %v328
  %v348 = vunpack.c.l.s4 1934713408
  %v349 = vunpack.c.0.s8 %v348
  %v350 = vlaneseq
  %v351 = vshrl.u32 %v350, 7
  %v352 = vsub.s32 %v349, %v351
  %v353 = vrot.slane %v345, %v352
  %v355 = vunpack.c.l.s4 1934713408
  %v356 = vunpack.c.0.s8 %v355
  %v357 = vlaneseq
  %v358 = vshrl.u32 %v357, 7
  %v359 = vsub.s32 %v356, %v358
  %v360 = vrot.slane %v346, %v359
  %v361 = vcombine.low %v337, %v353
  %v362 = vcombine.high %v337, %v353
  %v363 = vcombine.low %v344, %v360
  %v364 = vcombine.high %v344, %v360
  %366 = vrot.lane.b32.xlu0 %v140, 96
  %v367 = vpop.permute.xlu0 %366
  %369 = vrot.lane.b32.xlu0 %v140, 64
  %v370 = vpop.permute.xlu0 %369
  %372 = vrot.lane.b32.xlu0 %v140, 32
  %v373 = vpop.permute.xlu0 %372
  %v375 = vcombine.low %v140, %v370
  %v376 = vcombine.high %v140, %v370
  %v378 = vunpack.c.l.s4 1983009808
  %v379 = vunpack.c.0.s8 %v378
  %v380 = vlaneseq
  %v381 = vshrl.u32 %v380, 7
  %v382 = vsub.s32 %v379, %v381
  %v383 = vrot.slane %v375, %v382
  %v385 = vunpack.c.l.s4 1983009808
  %v386 = vunpack.c.0.s8 %v385
  %v387 = vlaneseq
  %v388 = vshrl.u32 %v387, 7
  %v389 = vsub.s32 %v386, %v388
  %v390 = vrot.slane %v376, %v389
  %v391 = vcombine.low %v367, %v373
  %v392 = vcombine.high %v367, %v373
  %v394 = vunpack.c.l.s4 1983009808
  %v395 = vunpack.c.0.s8 %v394
  %v396 = vlaneseq
  %v397 = vshrl.u32 %v396, 7
  %v398 = vsub.s32 %v395, %v397
  %v399 = vrot.slane %v391, %v398
  %v401 = vunpack.c.l.s4 1983009808
  %v402 = vunpack.c.0.s8 %v401
  %v403 = vlaneseq
  %v404 = vshrl.u32 %v403, 7
  %v405 = vsub.s32 %v402, %v404
  %v406 = vrot.slane %v392, %v405
  %v407 = vcombine.low %v383, %v399
  %v408 = vcombine.high %v383, %v399
  %v410 = vunpack.c.l.s4 1934713408
  %v411 = vunpack.c.0.s8 %v410
  %v412 = vlaneseq
  %v413 = vshrl.u32 %v412, 7
  %v414 = vsub.s32 %v411, %v413
  %v415 = vrot.slane %v407, %v414
  %v417 = vunpack.c.l.s4 1934713408
  %v418 = vunpack.c.0.s8 %v417
  %v419 = vlaneseq
  %v420 = vshrl.u32 %v419, 7
  %v421 = vsub.s32 %v418, %v420
  %v422 = vrot.slane %v408, %v421
  %v423 = vcombine.low %v390, %v406
  %v424 = vcombine.high %v390, %v406
  %v426 = vunpack.c.l.s4 1934713408
  %v427 = vunpack.c.0.s8 %v426
  %v428 = vlaneseq
  %v429 = vshrl.u32 %v428, 7
  %v430 = vsub.s32 %v427, %v429
  %v431 = vrot.slane %v423, %v430
  %v433 = vunpack.c.l.s4 1934713408
  %v434 = vunpack.c.0.s8 %v433
  %v435 = vlaneseq
  %v436 = vshrl.u32 %v435, 7
  %v437 = vsub.s32 %v434, %v436
  %v438 = vrot.slane %v424, %v437
  %v439 = vcombine.high %v415, 0.0
  %v440 = vcombine.high %v422, 0.0
  %v441 = vcombine.high %v431, 0.0
  %v442 = vcombine.high %v438, 0.0
  %v443 = vcombine.low %v415, %v422
  %v445 = vunpack.c.l.s4 1983009808
  %v446 = vunpack.c.0.s8 %v445
  %v447 = vlaneseq
  %v448 = vshrl.u32 %v447, 7
  %v449 = vsub.s32 %v446, %v448
  %v450 = vrot.slane %v443, %v449
  %v451 = vcombine.low %v439, %v440
  %v453 = vunpack.c.l.s4 1983009808
  %v454 = vunpack.c.0.s8 %v453
  %v455 = vlaneseq
  %v456 = vshrl.u32 %v455, 7
  %v457 = vsub.s32 %v454, %v456
  %v458 = vrot.slane %v451, %v457
  %v459 = vcombine.low %v431, %v438
  %v461 = vunpack.c.l.s4 1983009808
  %v462 = vunpack.c.0.s8 %v461
  %v463 = vlaneseq
  %v464 = vshrl.u32 %v463, 7
  %v465 = vsub.s32 %v462, %v464
  %v466 = vrot.slane %v459, %v465
  %v467 = vcombine.low %v441, %v442
  %v469 = vunpack.c.l.s4 1983009808
  %v470 = vunpack.c.0.s8 %v469
  %v471 = vlaneseq
  %v472 = vshrl.u32 %v471, 7
  %v473 = vsub.s32 %v470, %v472
  %v474 = vrot.slane %v467, %v473
  %v475 = vcombine.low %v450, %v458
  %v476 = vcombine.high %v450, %v458
  %v478 = vunpack.c.l.s4 1934713408
  %v479 = vunpack.c.0.s8 %v478
  %v480 = vlaneseq
  %v481 = vshrl.u32 %v480, 7
  %v482 = vsub.s32 %v479, %v481
  %v483 = vrot.slane %v475, %v482
  %v485 = vunpack.c.l.s4 1934713408
  %v486 = vunpack.c.0.s8 %v485
  %v487 = vlaneseq
  %v488 = vshrl.u32 %v487, 7
  %v489 = vsub.s32 %v486, %v488
  %v490 = vrot.slane %v476, %v489
  %v491 = vcombine.low %v466, %v474
  %v492 = vcombine.high %v466, %v474
  %v494 = vunpack.c.l.s4 1934713408
  %v495 = vunpack.c.0.s8 %v494
  %v496 = vlaneseq
  %v497 = vshrl.u32 %v496, 7
  %v498 = vsub.s32 %v495, %v497
  %v499 = vrot.slane %v491, %v498
  %v501 = vunpack.c.l.s4 1934713408
  %v502 = vunpack.c.0.s8 %v501
  %v503 = vlaneseq
  %v504 = vshrl.u32 %v503, 7
  %v505 = vsub.s32 %v502, %v504
  %v506 = vrot.slane %v492, %v505
  %v507 = vcombine.low %v483, %v499
  %v508 = vcombine.high %v483, %v499
  %v509 = vcombine.low %v490, %v506
  %v510 = vcombine.high %v490, %v506
  %512 = vrot.lane.b32.xlu0 %v136, 96
  %v513 = vpop.permute.xlu0 %512
  %515 = vrot.lane.b32.xlu0 %v136, 64
  %v516 = vpop.permute.xlu0 %515
  %518 = vrot.lane.b32.xlu0 %v136, 32
  %v519 = vpop.permute.xlu0 %518
  %v521 = vcombine.low %v136, %v516
  %v522 = vcombine.high %v136, %v516
  %v524 = vunpack.c.l.s4 1983009808
  %v525 = vunpack.c.0.s8 %v524
  %v526 = vlaneseq
  %v527 = vshrl.u32 %v526, 7
  %v528 = vsub.s32 %v525, %v527
  %v529 = vrot.slane %v521, %v528
  %v531 = vunpack.c.l.s4 1983009808
  %v532 = vunpack.c.0.s8 %v531
  %v533 = vlaneseq
  %v534 = vshrl.u32 %v533, 7
  %v535 = vsub.s32 %v532, %v534
  %v536 = vrot.slane %v522, %v535
  %v537 = vcombine.low %v513, %v519
  %v538 = vcombine.high %v513, %v519
  %v540 = vunpack.c.l.s4 1983009808
  %v541 = vunpack.c.0.s8 %v540
  %v542 = vlaneseq
  %v543 = vshrl.u32 %v542, 7
  %v544 = vsub.s32 %v541, %v543
  %v545 = vrot.slane %v537, %v544
  %v547 = vunpack.c.l.s4 1983009808
  %v548 = vunpack.c.0.s8 %v547
  %v549 = vlaneseq
  %v550 = vshrl.u32 %v549, 7
  %v551 = vsub.s32 %v548, %v550
  %v552 = vrot.slane %v538, %v551
  %v553 = vcombine.low %v529, %v545
  %v554 = vcombine.high %v529, %v545
  %v556 = vunpack.c.l.s4 1934713408
  %v557 = vunpack.c.0.s8 %v556
  %v558 = vlaneseq
  %v559 = vshrl.u32 %v558, 7
  %v560 = vsub.s32 %v557, %v559
  %v561 = vrot.slane %v553, %v560
  %v563 = vunpack.c.l.s4 1934713408
  %v564 = vunpack.c.0.s8 %v563
  %v565 = vlaneseq
  %v566 = vshrl.u32 %v565, 7
  %v567 = vsub.s32 %v564, %v566
  %v568 = vrot.slane %v554, %v567
  %v569 = vcombine.low %v536, %v552
  %v570 = vcombine.high %v536, %v552
  %v572 = vunpack.c.l.s4 1934713408
  %v573 = vunpack.c.0.s8 %v572
  %v574 = vlaneseq
  %v575 = vshrl.u32 %v574, 7
  %v576 = vsub.s32 %v573, %v575
  %v577 = vrot.slane %v569, %v576
  %v579 = vunpack.c.l.s4 1934713408
  %v580 = vunpack.c.0.s8 %v579
  %v581 = vlaneseq
  %v582 = vshrl.u32 %v581, 7
  %v583 = vsub.s32 %v580, %v582
  %v584 = vrot.slane %v570, %v583
  %v585 = vcombine.high %v561, 0.0
  %v586 = vcombine.high %v568, 0.0
  %v587 = vcombine.high %v577, 0.0
  %v588 = vcombine.high %v584, 0.0
  %v589 = vcombine.low %v561, %v568
  %v591 = vunpack.c.l.s4 1983009808
  %v592 = vunpack.c.0.s8 %v591
  %v593 = vlaneseq
  %v594 = vshrl.u32 %v593, 7
  %v595 = vsub.s32 %v592, %v594
  %v596 = vrot.slane %v589, %v595
  %v597 = vcombine.low %v585, %v586
  %v599 = vunpack.c.l.s4 1983009808
  %v600 = vunpack.c.0.s8 %v599
  %v601 = vlaneseq
  %v602 = vshrl.u32 %v601, 7
  %v603 = vsub.s32 %v600, %v602
  %v604 = vrot.slane %v597, %v603
  %v605 = vcombine.low %v577, %v584
  %v607 = vunpack.c.l.s4 1983009808
  %v608 = vunpack.c.0.s8 %v607
  %v609 = vlaneseq
  %v610 = vshrl.u32 %v609, 7
  %v611 = vsub.s32 %v608, %v610
  %v612 = vrot.slane %v605, %v611
  %v613 = vcombine.low %v587, %v588
  %v615 = vunpack.c.l.s4 1983009808
  %v616 = vunpack.c.0.s8 %v615
  %v617 = vlaneseq
  %v618 = vshrl.u32 %v617, 7
  %v619 = vsub.s32 %v616, %v618
  %v620 = vrot.slane %v613, %v619
  %v621 = vcombine.low %v596, %v604
  %v622 = vcombine.high %v596, %v604
  %v624 = vunpack.c.l.s4 1934713408
  %v625 = vunpack.c.0.s8 %v624
  %v626 = vlaneseq
  %v627 = vshrl.u32 %v626, 7
  %v628 = vsub.s32 %v625, %v627
  %v629 = vrot.slane %v621, %v628
  %v631 = vunpack.c.l.s4 1934713408
  %v632 = vunpack.c.0.s8 %v631
  %v633 = vlaneseq
  %v634 = vshrl.u32 %v633, 7
  %v635 = vsub.s32 %v632, %v634
  %v636 = vrot.slane %v622, %v635
  %v637 = vcombine.low %v612, %v620
  %v638 = vcombine.high %v612, %v620
  %v640 = vunpack.c.l.s4 1934713408
  %v641 = vunpack.c.0.s8 %v640
  %v642 = vlaneseq
  %v643 = vshrl.u32 %v642, 7
  %v644 = vsub.s32 %v641, %v643
  %v645 = vrot.slane %v637, %v644
  %v647 = vunpack.c.l.s4 1934713408
  %v648 = vunpack.c.0.s8 %v647
  %v649 = vlaneseq
  %v650 = vshrl.u32 %v649, 7
  %v651 = vsub.s32 %v648, %v650
  %v652 = vrot.slane %v638, %v651
  %v653 = vcombine.low %v629, %v645
  %v654 = vcombine.high %v629, %v645
  %v655 = vcombine.low %v636, %v652
  %v656 = vcombine.high %v636, %v652
  %658 = vrot.lane.b32.xlu0 %v142, 96
  %v659 = vpop.permute.xlu0 %658
  %661 = vrot.lane.b32.xlu0 %v142, 64
  %v662 = vpop.permute.xlu0 %661
  %664 = vrot.lane.b32.xlu0 %v142, 32
  %v665 = vpop.permute.xlu0 %664
  %v667 = vcombine.low %v142, %v662
  %v668 = vcombine.high %v142, %v662
  %v670 = vunpack.c.l.s4 1983009808
  %v671 = vunpack.c.0.s8 %v670
  %v672 = vlaneseq
  %v673 = vshrl.u32 %v672, 7
  %v674 = vsub.s32 %v671, %v673
  %v675 = vrot.slane %v667, %v674
  %v677 = vunpack.c.l.s4 1983009808
  %v678 = vunpack.c.0.s8 %v677
  %v679 = vlaneseq
  %v680 = vshrl.u32 %v679, 7
  %v681 = vsub.s32 %v678, %v680
  %v682 = vrot.slane %v668, %v681
  %v683 = vcombine.low %v659, %v665
  %v684 = vcombine.high %v659, %v665
  %v686 = vunpack.c.l.s4 1983009808
  %v687 = vunpack.c.0.s8 %v686
  %v688 = vlaneseq
  %v689 = vshrl.u32 %v688, 7
  %v690 = vsub.s32 %v687, %v689
  %v691 = vrot.slane %v683, %v690
  %v693 = vunpack.c.l.s4 1983009808
  %v694 = vunpack.c.0.s8 %v693
  %v695 = vlaneseq
  %v696 = vshrl.u32 %v695, 7
  %v697 = vsub.s32 %v694, %v696
  %v698 = vrot.slane %v684, %v697
  %v699 = vcombine.low %v675, %v691
  %v700 = vcombine.high %v675, %v691
  %v702 = vunpack.c.l.s4 1934713408
  %v703 = vunpack.c.0.s8 %v702
  %v704 = vlaneseq
  %v705 = vshrl.u32 %v704, 7
  %v706 = vsub.s32 %v703, %v705
  %v707 = vrot.slane %v699, %v706
  %v709 = vunpack.c.l.s4 1934713408
  %v710 = vunpack.c.0.s8 %v709
  %v711 = vlaneseq
  %v712 = vshrl.u32 %v711, 7
  %v713 = vsub.s32 %v710, %v712
  %v714 = vrot.slane %v700, %v713
  %v715 = vcombine.low %v682, %v698
  %v716 = vcombine.high %v682, %v698
  %v718 = vunpack.c.l.s4 1934713408
  %v719 = vunpack.c.0.s8 %v718
  %v720 = vlaneseq
  %v721 = vshrl.u32 %v720, 7
  %v722 = vsub.s32 %v719, %v721
  %v723 = vrot.slane %v715, %v722
  %v725 = vunpack.c.l.s4 1934713408
  %v726 = vunpack.c.0.s8 %v725
  %v727 = vlaneseq
  %v728 = vshrl.u32 %v727, 7
  %v729 = vsub.s32 %v726, %v728
  %v730 = vrot.slane %v716, %v729
  %v731 = vcombine.high %v707, 0.0
  %v732 = vcombine.high %v714, 0.0
  %v733 = vcombine.high %v723, 0.0
  %v734 = vcombine.high %v730, 0.0
  %v735 = vcombine.low %v707, %v714
  %v737 = vunpack.c.l.s4 1983009808
  %v738 = vunpack.c.0.s8 %v737
  %v739 = vlaneseq
  %v740 = vshrl.u32 %v739, 7
  %v741 = vsub.s32 %v738, %v740
  %v742 = vrot.slane %v735, %v741
  %v743 = vcombine.low %v731, %v732
  %v745 = vunpack.c.l.s4 1983009808
  %v746 = vunpack.c.0.s8 %v745
  %v747 = vlaneseq
  %v748 = vshrl.u32 %v747, 7
  %v749 = vsub.s32 %v746, %v748
  %v750 = vrot.slane %v743, %v749
  %v751 = vcombine.low %v723, %v730
  %v753 = vunpack.c.l.s4 1983009808
  %v754 = vunpack.c.0.s8 %v753
  %v755 = vlaneseq
  %v756 = vshrl.u32 %v755, 7
  %v757 = vsub.s32 %v754, %v756
  %v758 = vrot.slane %v751, %v757
  %v759 = vcombine.low %v733, %v734
  %v761 = vunpack.c.l.s4 1983009808
  %v762 = vunpack.c.0.s8 %v761
  %v763 = vlaneseq
  %v764 = vshrl.u32 %v763, 7
  %v765 = vsub.s32 %v762, %v764
  %v766 = vrot.slane %v759, %v765
  %v767 = vcombine.low %v742, %v750
  %v768 = vcombine.high %v742, %v750
  %v770 = vunpack.c.l.s4 1934713408
  %v771 = vunpack.c.0.s8 %v770
  %v772 = vlaneseq
  %v773 = vshrl.u32 %v772, 7
  %v774 = vsub.s32 %v771, %v773
  %v775 = vrot.slane %v767, %v774
  %v777 = vunpack.c.l.s4 1934713408
  %v778 = vunpack.c.0.s8 %v777
  %v779 = vlaneseq
  %v780 = vshrl.u32 %v779, 7
  %v781 = vsub.s32 %v778, %v780
  %v782 = vrot.slane %v768, %v781
  %v783 = vcombine.low %v758, %v766
  %v784 = vcombine.high %v758, %v766
  %v786 = vunpack.c.l.s4 1934713408
  %v787 = vunpack.c.0.s8 %v786
  %v788 = vlaneseq
  %v789 = vshrl.u32 %v788, 7
  %v790 = vsub.s32 %v787, %v789
  %v791 = vrot.slane %v783, %v790
  %v793 = vunpack.c.l.s4 1934713408
  %v794 = vunpack.c.0.s8 %v793
  %v795 = vlaneseq
  %v796 = vshrl.u32 %v795, 7
  %v797 = vsub.s32 %v794, %v796
  %v798 = vrot.slane %v784, %v797
  %v799 = vcombine.low %v775, %v791
  %v800 = vcombine.high %v775, %v791
  %v801 = vcombine.low %v782, %v798
  %v802 = vcombine.high %v782, %v798
  %804 = vrot.lane.b32.xlu0 %v211, 96
  %v805 = vpop.permute.xlu0 %804
  %807 = vrot.lane.b32.xlu0 %v211, 64
  %v808 = vpop.permute.xlu0 %807
  %810 = vrot.lane.b32.xlu0 %v211, 32
  %v811 = vpop.permute.xlu0 %810
  %v813 = vcombine.low %v211, %v808
  %v814 = vcombine.high %v211, %v808
  %v816 = vunpack.c.l.s4 1983009808
  %v817 = vunpack.c.0.s8 %v816
  %v818 = vlaneseq
  %v819 = vshrl.u32 %v818, 7
  %v820 = vsub.s32 %v817, %v819
  %v821 = vrot.slane %v813, %v820
  %v823 = vunpack.c.l.s4 1983009808
  %v824 = vunpack.c.0.s8 %v823
  %v825 = vlaneseq
  %v826 = vshrl.u32 %v825, 7
  %v827 = vsub.s32 %v824, %v826
  %v828 = vrot.slane %v814, %v827
  %v829 = vcombine.low %v805, %v811
  %v830 = vcombine.high %v805, %v811
  %v832 = vunpack.c.l.s4 1983009808
  %v833 = vunpack.c.0.s8 %v832
  %v834 = vlaneseq
  %v835 = vshrl.u32 %v834, 7
  %v836 = vsub.s32 %v833, %v835
  %v837 = vrot.slane %v829, %v836
  %v839 = vunpack.c.l.s4 1983009808
  %v840 = vunpack.c.0.s8 %v839
  %v841 = vlaneseq
  %v842 = vshrl.u32 %v841, 7
  %v843 = vsub.s32 %v840, %v842
  %v844 = vrot.slane %v830, %v843
  %v845 = vcombine.low %v821, %v837
  %v846 = vcombine.high %v821, %v837
  %v848 = vunpack.c.l.s4 1934713408
  %v849 = vunpack.c.0.s8 %v848
  %v850 = vlaneseq
  %v851 = vshrl.u32 %v850, 7
  %v852 = vsub.s32 %v849, %v851
  %v853 = vrot.slane %v845, %v852
  %v855 = vunpack.c.l.s4 1934713408
  %v856 = vunpack.c.0.s8 %v855
  %v857 = vlaneseq
  %v858 = vshrl.u32 %v857, 7
  %v859 = vsub.s32 %v856, %v858
  %v860 = vrot.slane %v846, %v859
  %v861 = vcombine.low %v828, %v844
  %v862 = vcombine.high %v828, %v844
  %v864 = vunpack.c.l.s4 1934713408
  %v865 = vunpack.c.0.s8 %v864
  %v866 = vlaneseq
  %v867 = vshrl.u32 %v866, 7
  %v868 = vsub.s32 %v865, %v867
  %v869 = vrot.slane %v861, %v868
  %v871 = vunpack.c.l.s4 1934713408
  %v872 = vunpack.c.0.s8 %v871
  %v873 = vlaneseq
  %v874 = vshrl.u32 %v873, 7
  %v875 = vsub.s32 %v872, %v874
  %v876 = vrot.slane %v862, %v875
  %v877 = vcombine.high %v853, 0.0
  %v878 = vcombine.high %v860, 0.0
  %v879 = vcombine.high %v869, 0.0
  %v880 = vcombine.high %v876, 0.0
  %v881 = vcombine.low %v853, %v860
  %v883 = vunpack.c.l.s4 1983009808
  %v884 = vunpack.c.0.s8 %v883
  %v885 = vlaneseq
  %v886 = vshrl.u32 %v885, 7
  %v887 = vsub.s32 %v884, %v886
  %v888 = vrot.slane %v881, %v887
  %v889 = vcombine.low %v877, %v878
  %v891 = vunpack.c.l.s4 1983009808
  %v892 = vunpack.c.0.s8 %v891
  %v893 = vlaneseq
  %v894 = vshrl.u32 %v893, 7
  %v895 = vsub.s32 %v892, %v894
  %v896 = vrot.slane %v889, %v895
  %v897 = vcombine.low %v869, %v876
  %v899 = vunpack.c.l.s4 1983009808
  %v900 = vunpack.c.0.s8 %v899
  %v901 = vlaneseq
  %v902 = vshrl.u32 %v901, 7
  %v903 = vsub.s32 %v900, %v902
  %v904 = vrot.slane %v897, %v903
  %v905 = vcombine.low %v879, %v880
  %v907 = vunpack.c.l.s4 1983009808
  %v908 = vunpack.c.0.s8 %v907
  %v909 = vlaneseq
  %v910 = vshrl.u32 %v909, 7
  %v911 = vsub.s32 %v908, %v910
  %v912 = vrot.slane %v905, %v911
  %v913 = vcombine.low %v888, %v896
  %v914 = vcombine.high %v888, %v896
  %v916 = vunpack.c.l.s4 1934713408
  %v917 = vunpack.c.0.s8 %v916
  %v918 = vlaneseq
  %v919 = vshrl.u32 %v918, 7
  %v920 = vsub.s32 %v917, %v919
  %v921 = vrot.slane %v913, %v920
  %v923 = vunpack.c.l.s4 1934713408
  %v924 = vunpack.c.0.s8 %v923
  %v925 = vlaneseq
  %v926 = vshrl.u32 %v925, 7
  %v927 = vsub.s32 %v924, %v926
  %v928 = vrot.slane %v914, %v927
  %v929 = vcombine.low %v904, %v912
  %v930 = vcombine.high %v904, %v912
  %v932 = vunpack.c.l.s4 1934713408
  %v933 = vunpack.c.0.s8 %v932
  %v934 = vlaneseq
  %v935 = vshrl.u32 %v934, 7
  %v936 = vsub.s32 %v933, %v935
  %v937 = vrot.slane %v929, %v936
  %v939 = vunpack.c.l.s4 1934713408
  %v940 = vunpack.c.0.s8 %v939
  %v941 = vlaneseq
  %v942 = vshrl.u32 %v941, 7
  %v943 = vsub.s32 %v940, %v942
  %v944 = vrot.slane %v930, %v943
  %v945 = vcombine.low %v921, %v937
  %v946 = vcombine.high %v921, %v937
  %v947 = vcombine.low %v928, %v944
  %v948 = vcombine.high %v928, %v944
  %950 = vrot.lane.b32.xlu0 %v216, 96
  %v951 = vpop.permute.xlu0 %950
  %953 = vrot.lane.b32.xlu0 %v216, 64
  %v954 = vpop.permute.xlu0 %953
  %956 = vrot.lane.b32.xlu0 %v216, 32
  %v957 = vpop.permute.xlu0 %956
  %v959 = vcombine.low %v216, %v954
  %v960 = vcombine.high %v216, %v954
  %v962 = vunpack.c.l.s4 1983009808
  %v963 = vunpack.c.0.s8 %v962
  %v964 = vlaneseq
  %v965 = vshrl.u32 %v964, 7
  %v966 = vsub.s32 %v963, %v965
  %v967 = vrot.slane %v959, %v966
  %v969 = vunpack.c.l.s4 1983009808
  %v970 = vunpack.c.0.s8 %v969
  %v971 = vlaneseq
  %v972 = vshrl.u32 %v971, 7
  %v973 = vsub.s32 %v970, %v972
  %v974 = vrot.slane %v960, %v973
  %v975 = vcombine.low %v951, %v957
  %v976 = vcombine.high %v951, %v957
  %v978 = vunpack.c.l.s4 1983009808
  %v979 = vunpack.c.0.s8 %v978
  %v980 = vlaneseq
  %v981 = vshrl.u32 %v980, 7
  %v982 = vsub.s32 %v979, %v981
  %v983 = vrot.slane %v975, %v982
  %v985 = vunpack.c.l.s4 1983009808
  %v986 = vunpack.c.0.s8 %v985
  %v987 = vlaneseq
  %v988 = vshrl.u32 %v987, 7
  %v989 = vsub.s32 %v986, %v988
  %v990 = vrot.slane %v976, %v989
  %v991 = vcombine.low %v967, %v983
  %v992 = vcombine.high %v967, %v983
  %v994 = vunpack.c.l.s4 1934713408
  %v995 = vunpack.c.0.s8 %v994
  %v996 = vlaneseq
  %v997 = vshrl.u32 %v996, 7
  %v998 = vsub.s32 %v995, %v997
  %v999 = vrot.slane %v991, %v998
  %v1001 = vunpack.c.l.s4 1934713408
  %v1002 = vunpack.c.0.s8 %v1001
  %v1003 = vlaneseq
  %v1004 = vshrl.u32 %v1003, 7
  %v1005 = vsub.s32 %v1002, %v1004
  %v1006 = vrot.slane %v992, %v1005
  %v1007 = vcombine.low %v974, %v990
  %v1008 = vcombine.high %v974, %v990
  %v1010 = vunpack.c.l.s4 1934713408
  %v1011 = vunpack.c.0.s8 %v1010
  %v1012 = vlaneseq
  %v1013 = vshrl.u32 %v1012, 7
  %v1014 = vsub.s32 %v1011, %v1013
  %v1015 = vrot.slane %v1007, %v1014
  %v1017 = vunpack.c.l.s4 1934713408
  %v1018 = vunpack.c.0.s8 %v1017
  %v1019 = vlaneseq
  %v1020 = vshrl.u32 %v1019, 7
  %v1021 = vsub.s32 %v1018, %v1020
  %v1022 = vrot.slane %v1008, %v1021
  %v1023 = vcombine.high %v999, 0.0
  %v1024 = vcombine.high %v1006, 0.0
  %v1025 = vcombine.high %v1015, 0.0
  %v1026 = vcombine.high %v1022, 0.0
  %v1027 = vcombine.low %v999, %v1006
  %v1029 = vunpack.c.l.s4 1983009808
  %v1030 = vunpack.c.0.s8 %v1029
  %v1031 = vlaneseq
  %v1032 = vshrl.u32 %v1031, 7
  %v1033 = vsub.s32 %v1030, %v1032
  %v1034 = vrot.slane %v1027, %v1033
  %v1035 = vcombine.low %v1023, %v1024
  %v1037 = vunpack.c.l.s4 1983009808
  %v1038 = vunpack.c.0.s8 %v1037
  %v1039 = vlaneseq
  %v1040 = vshrl.u32 %v1039, 7
  %v1041 = vsub.s32 %v1038, %v1040
  %v1042 = vrot.slane %v1035, %v1041
  %v1043 = vcombine.low %v1015, %v1022
  %v1045 = vunpack.c.l.s4 1983009808
  %v1046 = vunpack.c.0.s8 %v1045
  %v1047 = vlaneseq
  %v1048 = vshrl.u32 %v1047, 7
  %v1049 = vsub.s32 %v1046, %v1048
  %v1050 = vrot.slane %v1043, %v1049
  %v1051 = vcombine.low %v1025, %v1026
  %v1053 = vunpack.c.l.s4 1983009808
  %v1054 = vunpack.c.0.s8 %v1053
  %v1055 = vlaneseq
  %v1056 = vshrl.u32 %v1055, 7
  %v1057 = vsub.s32 %v1054, %v1056
  %v1058 = vrot.slane %v1051, %v1057
  %v1059 = vcombine.low %v1034, %v1042
  %v1060 = vcombine.high %v1034, %v1042
  %v1062 = vunpack.c.l.s4 1934713408
  %v1063 = vunpack.c.0.s8 %v1062
  %v1064 = vlaneseq
  %v1065 = vshrl.u32 %v1064, 7
  %v1066 = vsub.s32 %v1063, %v1065
  %v1067 = vrot.slane %v1059, %v1066
  %v1069 = vunpack.c.l.s4 1934713408
  %v1070 = vunpack.c.0.s8 %v1069
  %v1071 = vlaneseq
  %v1072 = vshrl.u32 %v1071, 7
  %v1073 = vsub.s32 %v1070, %v1072
  %v1074 = vrot.slane %v1060, %v1073
  %v1075 = vcombine.low %v1050, %v1058
  %v1076 = vcombine.high %v1050, %v1058
  %v1078 = vunpack.c.l.s4 1934713408
  %v1079 = vunpack.c.0.s8 %v1078
  %v1080 = vlaneseq
  %v1081 = vshrl.u32 %v1080, 7
  %v1082 = vsub.s32 %v1079, %v1081
  %v1083 = vrot.slane %v1075, %v1082
  %v1085 = vunpack.c.l.s4 1934713408
  %v1086 = vunpack.c.0.s8 %v1085
  %v1087 = vlaneseq
  %v1088 = vshrl.u32 %v1087, 7
  %v1089 = vsub.s32 %v1086, %v1088
  %v1090 = vrot.slane %v1076, %v1089
  %v1091 = vcombine.low %v1067, %v1083
  %v1092 = vcombine.high %v1067, %v1083
  %v1093 = vcombine.low %v1074, %v1090
  %v1094 = vcombine.high %v1074, %v1090
  %v1095 = vld [vmem:[%s1] sm:$0xff]
  %v1096 = vld [vmem:[%s1 + $0x8] sm:$0xff]
  %v1097 = vld [vmem:[%s1 + $0x10] sm:$0xff]
  %v1098 = vld [vmem:[%s1 + $0x18] sm:$0xff]
  %v1099 = vld [vmem:[%s1 + $0x20] sm:$0xff]
  %v1100 = vld [vmem:[%s1 + $0x28] sm:$0xff]
  %v1101 = vld [vmem:[%s1 + $0x30] sm:$0xff]
  %v1102 = vld [vmem:[%s1 + $0x38] sm:$0xff]
  %v1104 = vsel %vm60, %v361, 0
  %v1107 = vsel %vm60, %v653, 0
  %1109 = vmatprep.subr.mxu0 0.0
  %1110 = vmatpush1.xpose.msra.mxu0 %v1107
  %1111 = vmatprep.subr.mxu0 0.0
  %1112 = vmatpush1.xpose.msra.mxu0 0.0
  %1113 = vmatprep.subr.mxu0 0.0
  %1114 = vmatpush1.xpose.msra.mxu0 0.0
  %1115 = vmatprep.subr.mxu0 0.0
  %1116 = vmatpush1.xpose.msra.mxu0 0.0
  %1117 = vmatprep.subr.mxu0 0.0
  %1118 = vmatpush1.xpose.msra.mxu0 0.0
  %1119 = vmatprep.subr.mxu0 0.0
  %1120 = vmatpush1.xpose.msra.mxu0 0.0
  %1121 = vmatprep.subr.mxu0 0.0
  %1122 = vmatpush1.xpose.msra.mxu0 0.0
  %1123 = vmatprep.subr.mxu0 0.0
  %1124 = vmatpush1.xpose.msra.mxu0 0.0
  %1125 = vmatprep.subr.mxu0 0.0
  %1126 = vmatpush1.xpose.msra.mxu0 0.0
  %1127 = vmatprep.subr.mxu0 0.0
  %1128 = vmatpush1.xpose.msra.mxu0 0.0
  %1129 = vmatprep.subr.mxu0 0.0
  %1130 = vmatpush1.xpose.msra.mxu0 0.0
  %1131 = vmatprep.subr.mxu0 0.0
  %1132 = vmatpush1.xpose.msra.mxu0 0.0
  %1133 = vmatprep.subr.mxu0 0.0
  %1134 = vmatpush1.xpose.msra.mxu0 0.0
  %1135 = vmatprep.subr.mxu0 0.0
  %1136 = vmatpush1.xpose.msra.mxu0 0.0
  %1137 = vmatprep.subr.mxu0 0.0
  %1138 = vmatpush1.xpose.msra.mxu0 0.0
  %1139 = vmatprep.subr.mxu0 0.0
  %1140 = vmatpush1.xpose.msra.mxu0 0.0
  %1141 = vmatprep.subr.mxu0 0.0
  %1142 = vmatpush1.xpose.msra.mxu0 0.0
  %1143 = vmatprep.subr.mxu0 0.0
  %1144 = vmatpush1.xpose.msra.mxu0 0.0
  %1145 = vmatprep.subr.mxu0 0.0
  %1146 = vmatpush1.xpose.msra.mxu0 0.0
  %1147 = vmatprep.subr.mxu0 0.0
  %1148 = vmatpush1.xpose.msra.mxu0 0.0
  %1149 = vmatprep.subr.mxu0 0.0
  %1150 = vmatpush1.xpose.msra.mxu0 0.0
  %1151 = vmatprep.subr.mxu0 0.0
  %1152 = vmatpush1.xpose.msra.mxu0 0.0
  %1153 = vmatprep.subr.mxu0 0.0
  %1154 = vmatpush1.xpose.msra.mxu0 0.0
  %1155 = vmatprep.subr.mxu0 0.0
  %1156 = vmatpush1.xpose.msra.mxu0 0.0
  %1157 = vmatprep.subr.mxu0 0.0
  %1158 = vmatpush1.xpose.msra.mxu0 0.0
  %1159 = vmatprep.subr.mxu0 0.0
  %1160 = vmatpush1.xpose.msra.mxu0 0.0
  %1161 = vmatprep.subr.mxu0 0.0
  %1162 = vmatpush1.xpose.msra.mxu0 0.0
  %1163 = vmatprep.subr.mxu0 0.0
  %1164 = vmatpush1.xpose.msra.mxu0 0.0
  %1165 = vmatprep.subr.mxu0 0.0
  %1166 = vmatpush1.xpose.msra.mxu0 0.0
  %1167 = vmatprep.subr.mxu0 0.0
  %1168 = vmatpush1.xpose.msra.mxu0 0.0
  %1169 = vmatprep.subr.mxu0 0.0
  %1170 = vmatpush1.xpose.msra.mxu0 0.0
  %1171 = vmatprep.subr.mxu0 0.0
  %1172 = vmatpush1.xpose.msra.mxu0 0.0
  %1173 = vmatprep.mubr.f32.mxu0 0.0
  %1174 = vmatmul.mubr.f32.gmra.mrb[0].mxu0 %v1104
  %v1175 = vpop.f32.mrb[0].mxu0
  %v1176 = vadd.f32 %v1095, %v1175
  %v1177 = vpop.f32.mrb[0].mxu0
  %1178 = vdwg.mxu0
  %v1180 = vsel %vm60, %v362, 0
  %v1183 = vsel %vm60, %v654, 0
  %1185 = vmatprep.subr.mxu0 0.0
  %1186 = vmatpush1.xpose.msra.mxu0 %v1183
  %1187 = vmatprep.subr.mxu0 0.0
  %1188 = vmatpush1.xpose.msra.mxu0 0.0
  %1189 = vmatprep.subr.mxu0 0.0
  %1190 = vmatpush1.xpose.msra.mxu0 0.0
  %1191 = vmatprep.subr.mxu0 0.0
  %1192 = vmatpush1.xpose.msra.mxu0 0.0
  %1193 = vmatprep.subr.mxu0 0.0
  %1194 = vmatpush1.xpose.msra.mxu0 0.0
  %1195 = vmatprep.subr.mxu0 0.0
  %1196 = vmatpush1.xpose.msra.mxu0 0.0
  %1197 = vmatprep.subr.mxu0 0.0
  %1198 = vmatpush1.xpose.msra.mxu0 0.0
  %1199 = vmatprep.subr.mxu0 0.0
  %1200 = vmatpush1.xpose.msra.mxu0 0.0
  %1201 = vmatprep.subr.mxu0 0.0
  %1202 = vmatpush1.xpose.msra.mxu0 0.0
  %1203 = vmatprep.subr.mxu0 0.0
  %1204 = vmatpush1.xpose.msra.mxu0 0.0
  %1205 = vmatprep.subr.mxu0 0.0
  %1206 = vmatpush1.xpose.msra.mxu0 0.0
  %1207 = vmatprep.subr.mxu0 0.0
  %1208 = vmatpush1.xpose.msra.mxu0 0.0
  %1209 = vmatprep.subr.mxu0 0.0
  %1210 = vmatpush1.xpose.msra.mxu0 0.0
  %1211 = vmatprep.subr.mxu0 0.0
  %1212 = vmatpush1.xpose.msra.mxu0 0.0
  %1213 = vmatprep.subr.mxu0 0.0
  %1214 = vmatpush1.xpose.msra.mxu0 0.0
  %1215 = vmatprep.subr.mxu0 0.0
  %1216 = vmatpush1.xpose.msra.mxu0 0.0
  %1217 = vmatprep.subr.mxu0 0.0
  %1218 = vmatpush1.xpose.msra.mxu0 0.0
  %1219 = vmatprep.subr.mxu0 0.0
  %1220 = vmatpush1.xpose.msra.mxu0 0.0
  %1221 = vmatprep.subr.mxu0 0.0
  %1222 = vmatpush1.xpose.msra.mxu0 0.0
  %1223 = vmatprep.subr.mxu0 0.0
  %1224 = vmatpush1.xpose.msra.mxu0 0.0
  %1225 = vmatprep.subr.mxu0 0.0
  %1226 = vmatpush1.xpose.msra.mxu0 0.0
  %1227 = vmatprep.subr.mxu0 0.0
  %1228 = vmatpush1.xpose.msra.mxu0 0.0
  %1229 = vmatprep.subr.mxu0 0.0
  %1230 = vmatpush1.xpose.msra.mxu0 0.0
  %1231 = vmatprep.subr.mxu0 0.0
  %1232 = vmatpush1.xpose.msra.mxu0 0.0
  %1233 = vmatprep.subr.mxu0 0.0
  %1234 = vmatpush1.xpose.msra.mxu0 0.0
  %1235 = vmatprep.subr.mxu0 0.0
  %1236 = vmatpush1.xpose.msra.mxu0 0.0
  %1237 = vmatprep.subr.mxu0 0.0
  %1238 = vmatpush1.xpose.msra.mxu0 0.0
  %1239 = vmatprep.subr.mxu0 0.0
  %1240 = vmatpush1.xpose.msra.mxu0 0.0
  %1241 = vmatprep.subr.mxu0 0.0
  %1242 = vmatpush1.xpose.msra.mxu0 0.0
  %1243 = vmatprep.subr.mxu0 0.0
  %1244 = vmatpush1.xpose.msra.mxu0 0.0
  %1245 = vmatprep.subr.mxu0 0.0
  %1246 = vmatpush1.xpose.msra.mxu0 0.0
  %1247 = vmatprep.subr.mxu0 0.0
  %1248 = vmatpush1.xpose.msra.mxu0 0.0
  %1249 = vmatprep.mubr.f32.mxu0 0.0
  %1250 = vmatmul.mubr.f32.gmra.mrb[0].mxu0 %v1180
  %v1251 = vpop.f32.mrb[0].mxu0
  %v1252 = vadd.f32 %v1096, %v1251
  %v1253 = vpop.f32.mrb[0].mxu0
  %1254 = vdwg.mxu0
  %v1256 = vsel %vm60, %v363, 0
  %v1259 = vsel %vm60, %v655, 0
  %1261 = vmatprep.subr.mxu0 0.0
  %1262 = vmatpush1.xpose.msra.mxu0 %v1259
  %1263 = vmatprep.subr.mxu0 0.0
  %1264 = vmatpush1.xpose.msra.mxu0 0.0
  %1265 = vmatprep.subr.mxu0 0.0
  %1266 = vmatpush1.xpose.msra.mxu0 0.0
  %1267 = vmatprep.subr.mxu0 0.0
  %1268 = vmatpush1.xpose.msra.mxu0 0.0
  %1269 = vmatprep.subr.mxu0 0.0
  %1270 = vmatpush1.xpose.msra.mxu0 0.0
  %1271 = vmatprep.subr.mxu0 0.0
  %1272 = vmatpush1.xpose.msra.mxu0 0.0
  %1273 = vmatprep.subr.mxu0 0.0
  %1274 = vmatpush1.xpose.msra.mxu0 0.0
  %1275 = vmatprep.subr.mxu0 0.0
  %1276 = vmatpush1.xpose.msra.mxu0 0.0
  %1277 = vmatprep.subr.mxu0 0.0
  %1278 = vmatpush1.xpose.msra.mxu0 0.0
  %1279 = vmatprep.subr.mxu0 0.0
  %1280 = vmatpush1.xpose.msra.mxu0 0.0
  %1281 = vmatprep.subr.mxu0 0.0
  %1282 = vmatpush1.xpose.msra.mxu0 0.0
  %1283 = vmatprep.subr.mxu0 0.0
  %1284 = vmatpush1.xpose.msra.mxu0 0.0
  %1285 = vmatprep.subr.mxu0 0.0
  %1286 = vmatpush1.xpose.msra.mxu0 0.0
  %1287 = vmatprep.subr.mxu0 0.0
  %1288 = vmatpush1.xpose.msra.mxu0 0.0
  %1289 = vmatprep.subr.mxu0 0.0
  %1290 = vmatpush1.xpose.msra.mxu0 0.0
  %1291 = vmatprep.subr.mxu0 0.0
  %1292 = vmatpush1.xpose.msra.mxu0 0.0
  %1293 = vmatprep.subr.mxu0 0.0
  %1294 = vmatpush1.xpose.msra.mxu0 0.0
  %1295 = vmatprep.subr.mxu0 0.0
  %1296 = vmatpush1.xpose.msra.mxu0 0.0
  %1297 = vmatprep.subr.mxu0 0.0
  %1298 = vmatpush1.xpose.msra.mxu0 0.0
  %1299 = vmatprep.subr.mxu0 0.0
  %1300 = vmatpush1.xpose.msra.mxu0 0.0
  %1301 = vmatprep.subr.mxu0 0.0
  %1302 = vmatpush1.xpose.msra.mxu0 0.0
  %1303 = vmatprep.subr.mxu0 0.0
  %1304 = vmatpush1.xpose.msra.mxu0 0.0
  %1305 = vmatprep.subr.mxu0 0.0
  %1306 = vmatpush1.xpose.msra.mxu0 0.0
  %1307 = vmatprep.subr.mxu0 0.0
  %1308 = vmatpush1.xpose.msra.mxu0 0.0
  %1309 = vmatprep.subr.mxu0 0.0
  %1310 = vmatpush1.xpose.msra.mxu0 0.0
  %1311 = vmatprep.subr.mxu0 0.0
  %1312 = vmatpush1.xpose.msra.mxu0 0.0
  %1313 = vmatprep.subr.mxu0 0.0
  %1314 = vmatpush1.xpose.msra.mxu0 0.0
  %1315 = vmatprep.subr.mxu0 0.0
  %1316 = vmatpush1.xpose.msra.mxu0 0.0
  %1317 = vmatprep.subr.mxu0 0.0
  %1318 = vmatpush1.xpose.msra.mxu0 0.0
  %1319 = vmatprep.subr.mxu0 0.0
  %1320 = vmatpush1.xpose.msra.mxu0 0.0
  %1321 = vmatprep.subr.mxu0 0.0
  %1322 = vmatpush1.xpose.msra.mxu0 0.0
  %1323 = vmatprep.subr.mxu0 0.0
  %1324 = vmatpush1.xpose.msra.mxu0 0.0
  %1325 = vmatprep.mubr.f32.mxu0 0.0
  %1326 = vmatmul.mubr.f32.gmra.mrb[0].mxu0 %v1256
  %v1327 = vpop.f32.mrb[0].mxu0
  %v1328 = vadd.f32 %v1097, %v1327
  %v1329 = vpop.f32.mrb[0].mxu0
  %1330 = vdwg.mxu0
  %v1332 = vsel %vm60, %v364, 0
  %v1335 = vsel %vm60, %v656, 0
  %1337 = vmatprep.subr.mxu0 0.0
  %1338 = vmatpush1.xpose.msra.mxu0 %v1335
  %1339 = vmatprep.subr.mxu0 0.0
  %1340 = vmatpush1.xpose.msra.mxu0 0.0
  %1341 = vmatprep.subr.mxu0 0.0
  %1342 = vmatpush1.xpose.msra.mxu0 0.0
  %1343 = vmatprep.subr.mxu0 0.0
  %1344 = vmatpush1.xpose.msra.mxu0 0.0
  %1345 = vmatprep.subr.mxu0 0.0
  %1346 = vmatpush1.xpose.msra.mxu0 0.0
  %1347 = vmatprep.subr.mxu0 0.0
  %1348 = vmatpush1.xpose.msra.mxu0 0.0
  %1349 = vmatprep.subr.mxu0 0.0
  %1350 = vmatpush1.xpose.msra.mxu0 0.0
  %1351 = vmatprep.subr.mxu0 0.0
  %1352 = vmatpush1.xpose.msra.mxu0 0.0
  %1353 = vmatprep.subr.mxu0 0.0
  %1354 = vmatpush1.xpose.msra.mxu0 0.0
  %1355 = vmatprep.subr.mxu0 0.0
  %1356 = vmatpush1.xpose.msra.mxu0 0.0
  %1357 = vmatprep.subr.mxu0 0.0
  %1358 = vmatpush1.xpose.msra.mxu0 0.0
  %1359 = vmatprep.subr.mxu0 0.0
  %1360 = vmatpush1.xpose.msra.mxu0 0.0
  %1361 = vmatprep.subr.mxu0 0.0
  %1362 = vmatpush1.xpose.msra.mxu0 0.0
  %1363 = vmatprep.subr.mxu0 0.0
  %1364 = vmatpush1.xpose.msra.mxu0 0.0
  %1365 = vmatprep.subr.mxu0 0.0
  %1366 = vmatpush1.xpose.msra.mxu0 0.0
  %1367 = vmatprep.subr.mxu0 0.0
  %1368 = vmatpush1.xpose.msra.mxu0 0.0
  %1369 = vmatprep.subr.mxu0 0.0
  %1370 = vmatpush1.xpose.msra.mxu0 0.0
  %1371 = vmatprep.subr.mxu0 0.0
  %1372 = vmatpush1.xpose.msra.mxu0 0.0
  %1373 = vmatprep.subr.mxu0 0.0
  %1374 = vmatpush1.xpose.msra.mxu0 0.0
  %1375 = vmatprep.subr.mxu0 0.0
  %1376 = vmatpush1.xpose.msra.mxu0 0.0
  %1377 = vmatprep.subr.mxu0 0.0
  %1378 = vmatpush1.xpose.msra.mxu0 0.0
  %1379 = vmatprep.subr.mxu0 0.0
  %1380 = vmatpush1.xpose.msra.mxu0 0.0
  %1381 = vmatprep.subr.mxu0 0.0
  %1382 = vmatpush1.xpose.msra.mxu0 0.0
  %1383 = vmatprep.subr.mxu0 0.0
  %1384 = vmatpush1.xpose.msra.mxu0 0.0
  %1385 = vmatprep.subr.mxu0 0.0
  %1386 = vmatpush1.xpose.msra.mxu0 0.0
  %1387 = vmatprep.subr.mxu0 0.0
  %1388 = vmatpush1.xpose.msra.mxu0 0.0
  %1389 = vmatprep.subr.mxu0 0.0
  %1390 = vmatpush1.xpose.msra.mxu0 0.0
  %1391 = vmatprep.subr.mxu0 0.0
  %1392 = vmatpush1.xpose.msra.mxu0 0.0
  %1393 = vmatprep.subr.mxu0 0.0
  %1394 = vmatpush1.xpose.msra.mxu0 0.0
  %1395 = vmatprep.subr.mxu0 0.0
  %1396 = vmatpush1.xpose.msra.mxu0 0.0
  %1397 = vmatprep.subr.mxu0 0.0
  %1398 = vmatpush1.xpose.msra.mxu0 0.0
  %1399 = vmatprep.subr.mxu0 0.0
  %1400 = vmatpush1.xpose.msra.mxu0 0.0
  %1401 = vmatprep.mubr.f32.mxu0 0.0
  %1402 = vmatmul.mubr.f32.gmra.mrb[0].mxu0 %v1332
  %v1403 = vpop.f32.mrb[0].mxu0
  %v1404 = vadd.f32 %v1098, %v1403
  %v1405 = vpop.f32.mrb[0].mxu0
  %1406 = vdwg.mxu0
  %v1408 = vsel %vm60, %v507, 0
  %v1411 = vsel %vm60, %v799, 0
  %1413 = vmatprep.subr.mxu0 0.0
  %1414 = vmatpush1.xpose.msra.mxu0 %v1411
  %1415 = vmatprep.subr.mxu0 0.0
  %1416 = vmatpush1.xpose.msra.mxu0 0.0
  %1417 = vmatprep.subr.mxu0 0.0
  %1418 = vmatpush1.xpose.msra.mxu0 0.0
  %1419 = vmatprep.subr.mxu0 0.0
  %1420 = vmatpush1.xpose.msra.mxu0 0.0
  %1421 = vmatprep.subr.mxu0 0.0
  %1422 = vmatpush1.xpose.msra.mxu0 0.0
  %1423 = vmatprep.subr.mxu0 0.0
  %1424 = vmatpush1.xpose.msra.mxu0 0.0
  %1425 = vmatprep.subr.mxu0 0.0
  %1426 = vmatpush1.xpose.msra.mxu0 0.0
  %1427 = vmatprep.subr.mxu0 0.0
  %1428 = vmatpush1.xpose.msra.mxu0 0.0
  %1429 = vmatprep.subr.mxu0 0.0
  %1430 = vmatpush1.xpose.msra.mxu0 0.0
  %1431 = vmatprep.subr.mxu0 0.0
  %1432 = vmatpush1.xpose.msra.mxu0 0.0
  %1433 = vmatprep.subr.mxu0 0.0
  %1434 = vmatpush1.xpose.msra.mxu0 0.0
  %1435 = vmatprep.subr.mxu0 0.0
  %1436 = vmatpush1.xpose.msra.mxu0 0.0
  %1437 = vmatprep.subr.mxu0 0.0
  %1438 = vmatpush1.xpose.msra.mxu0 0.0
  %1439 = vmatprep.subr.mxu0 0.0
  %1440 = vmatpush1.xpose.msra.mxu0 0.0
  %1441 = vmatprep.subr.mxu0 0.0
  %1442 = vmatpush1.xpose.msra.mxu0 0.0
  %1443 = vmatprep.subr.mxu0 0.0
  %1444 = vmatpush1.xpose.msra.mxu0 0.0
  %1445 = vmatprep.subr.mxu0 0.0
  %1446 = vmatpush1.xpose.msra.mxu0 0.0
  %1447 = vmatprep.subr.mxu0 0.0
  %1448 = vmatpush1.xpose.msra.mxu0 0.0
  %1449 = vmatprep.subr.mxu0 0.0
  %1450 = vmatpush1.xpose.msra.mxu0 0.0
  %1451 = vmatprep.subr.mxu0 0.0
  %1452 = vmatpush1.xpose.msra.mxu0 0.0
  %1453 = vmatprep.subr.mxu0 0.0
  %1454 = vmatpush1.xpose.msra.mxu0 0.0
  %1455 = vmatprep.subr.mxu0 0.0
  %1456 = vmatpush1.xpose.msra.mxu0 0.0
  %1457 = vmatprep.subr.mxu0 0.0
  %1458 = vmatpush1.xpose.msra.mxu0 0.0
  %1459 = vmatprep.subr.mxu0 0.0
  %1460 = vmatpush1.xpose.msra.mxu0 0.0
  %1461 = vmatprep.subr.mxu0 0.0
  %1462 = vmatpush1.xpose.msra.mxu0 0.0
  %1463 = vmatprep.subr.mxu0 0.0
  %1464 = vmatpush1.xpose.msra.mxu0 0.0
  %1465 = vmatprep.subr.mxu0 0.0
  %1466 = vmatpush1.xpose.msra.mxu0 0.0
  %1467 = vmatprep.subr.mxu0 0.0
  %1468 = vmatpush1.xpose.msra.mxu0 0.0
  %1469 = vmatprep.subr.mxu0 0.0
  %1470 = vmatpush1.xpose.msra.mxu0 0.0
  %1471 = vmatprep.subr.mxu0 0.0
  %1472 = vmatpush1.xpose.msra.mxu0 0.0
  %1473 = vmatprep.subr.mxu0 0.0
  %1474 = vmatpush1.xpose.msra.mxu0 0.0
  %1475 = vmatprep.subr.mxu0 0.0
  %1476 = vmatpush1.xpose.msra.mxu0 0.0
  %1477 = vmatprep.mubr.f32.mxu0 0.0
  %1478 = vmatmul.mubr.f32.gmra.mrb[0].mxu0 %v1408
  %v1479 = vpop.f32.mrb[0].mxu0
  %v1480 = vadd.f32 %v1099, %v1479
  %v1481 = vpop.f32.mrb[0].mxu0
  %1482 = vdwg.mxu0
  %v1484 = vsel %vm60, %v508, 0
  %v1487 = vsel %vm60, %v800, 0
  %1489 = vmatprep.subr.mxu0 0.0
  %1490 = vmatpush1.xpose.msra.mxu0 %v1487
  %1491 = vmatprep.subr.mxu0 0.0
  %1492 = vmatpush1.xpose.msra.mxu0 0.0
  %1493 = vmatprep.subr.mxu0 0.0
  %1494 = vmatpush1.xpose.msra.mxu0 0.0
  %1495 = vmatprep.subr.mxu0 0.0
  %1496 = vmatpush1.xpose.msra.mxu0 0.0
  %1497 = vmatprep.subr.mxu0 0.0
  %1498 = vmatpush1.xpose.msra.mxu0 0.0
  %1499 = vmatprep.subr.mxu0 0.0
  %1500 = vmatpush1.xpose.msra.mxu0 0.0
  %1501 = vmatprep.subr.mxu0 0.0
  %1502 = vmatpush1.xpose.msra.mxu0 0.0
  %1503 = vmatprep.subr.mxu0 0.0
  %1504 = vmatpush1.xpose.msra.mxu0 0.0
  %1505 = vmatprep.subr.mxu0 0.0
  %1506 = vmatpush1.xpose.msra.mxu0 0.0
  %1507 = vmatprep.subr.mxu0 0.0
  %1508 = vmatpush1.xpose.msra.mxu0 0.0
  %1509 = vmatprep.subr.mxu0 0.0
  %1510 = vmatpush1.xpose.msra.mxu0 0.0
  %1511 = vmatprep.subr.mxu0 0.0
  %1512 = vmatpush1.xpose.msra.mxu0 0.0
  %1513 = vmatprep.subr.mxu0 0.0
  %1514 = vmatpush1.xpose.msra.mxu0 0.0
  %1515 = vmatprep.subr.mxu0 0.0
  %1516 = vmatpush1.xpose.msra.mxu0 0.0
  %1517 = vmatprep.subr.mxu0 0.0
  %1518 = vmatpush1.xpose.msra.mxu0 0.0
  %1519 = vmatprep.subr.mxu0 0.0
  %1520 = vmatpush1.xpose.msra.mxu0 0.0
  %1521 = vmatprep.subr.mxu0 0.0
  %1522 = vmatpush1.xpose.msra.mxu0 0.0
  %1523 = vmatprep.subr.mxu0 0.0
  %1524 = vmatpush1.xpose.msra.mxu0 0.0
  %1525 = vmatprep.subr.mxu0 0.0
  %1526 = vmatpush1.xpose.msra.mxu0 0.0
  %1527 = vmatprep.subr.mxu0 0.0
  %1528 = vmatpush1.xpose.msra.mxu0 0.0
  %1529 = vmatprep.subr.mxu0 0.0
  %1530 = vmatpush1.xpose.msra.mxu0 0.0
  %1531 = vmatprep.subr.mxu0 0.0
  %1532 = vmatpush1.xpose.msra.mxu0 0.0
  %1533 = vmatprep.subr.mxu0 0.0
  %1534 = vmatpush1.xpose.msra.mxu0 0.0
  %1535 = vmatprep.subr.mxu0 0.0
  %1536 = vmatpush1.xpose.msra.mxu0 0.0
  %1537 = vmatprep.subr.mxu0 0.0
  %1538 = vmatpush1.xpose.msra.mxu0 0.0
  %1539 = vmatprep.subr.mxu0 0.0
  %1540 = vmatpush1.xpose.msra.mxu0 0.0
  %1541 = vmatprep.subr.mxu0 0.0
  %1542 = vmatpush1.xpose.msra.mxu0 0.0
  %1543 = vmatprep.subr.mxu0 0.0
  %1544 = vmatpush1.xpose.msra.mxu0 0.0
  %1545 = vmatprep.subr.mxu0 0.0
  %1546 = vmatpush1.xpose.msra.mxu0 0.0
  %1547 = vmatprep.subr.mxu0 0.0
  %1548 = vmatpush1.xpose.msra.mxu0 0.0
  %1549 = vmatprep.subr.mxu0 0.0
  %1550 = vmatpush1.xpose.msra.mxu0 0.0
  %1551 = vmatprep.subr.mxu0 0.0
  %1552 = vmatpush1.xpose.msra.mxu0 0.0
  %1553 = vmatprep.mubr.f32.mxu0 0.0
  %1554 = vmatmul.mubr.f32.gmra.mrb[0].mxu0 %v1484
  %v1555 = vpop.f32.mrb[0].mxu0
  %v1556 = vadd.f32 %v1100, %v1555
  %v1557 = vpop.f32.mrb[0].mxu0
  %1558 = vdwg.mxu0
  %v1560 = vsel %vm60, %v509, 0
  %v1563 = vsel %vm60, %v801, 0
  %1565 = vmatprep.subr.mxu0 0.0
  %1566 = vmatpush1.xpose.msra.mxu0 %v1563
  %1567 = vmatprep.subr.mxu0 0.0
  %1568 = vmatpush1.xpose.msra.mxu0 0.0
  %1569 = vmatprep.subr.mxu0 0.0
  %1570 = vmatpush1.xpose.msra.mxu0 0.0
  %1571 = vmatprep.subr.mxu0 0.0
  %1572 = vmatpush1.xpose.msra.mxu0 0.0
  %1573 = vmatprep.subr.mxu0 0.0
  %1574 = vmatpush1.xpose.msra.mxu0 0.0
  %1575 = vmatprep.subr.mxu0 0.0
  %1576 = vmatpush1.xpose.msra.mxu0 0.0
  %1577 = vmatprep.subr.mxu0 0.0
  %1578 = vmatpush1.xpose.msra.mxu0 0.0
  %1579 = vmatprep.subr.mxu0 0.0
  %1580 = vmatpush1.xpose.msra.mxu0 0.0
  %1581 = vmatprep.subr.mxu0 0.0
  %1582 = vmatpush1.xpose.msra.mxu0 0.0
  %1583 = vmatprep.subr.mxu0 0.0
  %1584 = vmatpush1.xpose.msra.mxu0 0.0
  %1585 = vmatprep.subr.mxu0 0.0
  %1586 = vmatpush1.xpose.msra.mxu0 0.0
  %1587 = vmatprep.subr.mxu0 0.0
  %1588 = vmatpush1.xpose.msra.mxu0 0.0
  %1589 = vmatprep.subr.mxu0 0.0
  %1590 = vmatpush1.xpose.msra.mxu0 0.0
  %1591 = vmatprep.subr.mxu0 0.0
  %1592 = vmatpush1.xpose.msra.mxu0 0.0
  %1593 = vmatprep.subr.mxu0 0.0
  %1594 = vmatpush1.xpose.msra.mxu0 0.0
  %1595 = vmatprep.subr.mxu0 0.0
  %1596 = vmatpush1.xpose.msra.mxu0 0.0
  %1597 = vmatprep.subr.mxu0 0.0
  %1598 = vmatpush1.xpose.msra.mxu0 0.0
  %1599 = vmatprep.subr.mxu0 0.0
  %1600 = vmatpush1.xpose.msra.mxu0 0.0
  %1601 = vmatprep.subr.mxu0 0.0
  %1602 = vmatpush1.xpose.msra.mxu0 0.0
  %1603 = vmatprep.subr.mxu0 0.0
  %1604 = vmatpush1.xpose.msra.mxu0 0.0
  %1605 = vmatprep.subr.mxu0 0.0
  %1606 = vmatpush1.xpose.msra.mxu0 0.0
  %1607 = vmatprep.subr.mxu0 0.0
  %1608 = vmatpush1.xpose.msra.mxu0 0.0
  %1609 = vmatprep.subr.mxu0 0.0
  %1610 = vmatpush1.xpose.msra.mxu0 0.0
  %1611 = vmatprep.subr.mxu0 0.0
  %1612 = vmatpush1.xpose.msra.mxu0 0.0
  %1613 = vmatprep.subr.mxu0 0.0
  %1614 = vmatpush1.xpose.msra.mxu0 0.0
  %1615 = vmatprep.subr.mxu0 0.0
  %1616 = vmatpush1.xpose.msra.mxu0 0.0
  %1617 = vmatprep.subr.mxu0 0.0
  %1618 = vmatpush1.xpose.msra.mxu0 0.0
  %1619 = vmatprep.subr.mxu0 0.0
  %1620 = vmatpush1.xpose.msra.mxu0 0.0
  %1621 = vmatprep.subr.mxu0 0.0
  %1622 = vmatpush1.xpose.msra.mxu0 0.0
  %1623 = vmatprep.subr.mxu0 0.0
  %1624 = vmatpush1.xpose.msra.mxu0 0.0
  %1625 = vmatprep.subr.mxu0 0.0
  %1626 = vmatpush1.xpose.msra.mxu0 0.0
  %1627 = vmatprep.subr.mxu0 0.0
  %1628 = vmatpush1.xpose.msra.mxu0 0.0
  %1629 = vmatprep.mubr.f32.mxu0 0.0
  %1630 = vmatmul.mubr.f32.gmra.mrb[0].mxu0 %v1560
  %v1631 = vpop.f32.mrb[0].mxu0
  %v1632 = vadd.f32 %v1101, %v1631
  %v1633 = vpop.f32.mrb[0].mxu0
  %1634 = vdwg.mxu0
  %v1636 = vsel %vm60, %v510, 0
  %v1639 = vsel %vm60, %v802, 0
  %1641 = vmatprep.subr.mxu0 0.0
  %1642 = vmatpush1.xpose.msra.mxu0 %v1639
  %1643 = vmatprep.subr.mxu0 0.0
  %1644 = vmatpush1.xpose.msra.mxu0 0.0
  %1645 = vmatprep.subr.mxu0 0.0
  %1646 = vmatpush1.xpose.msra.mxu0 0.0
  %1647 = vmatprep.subr.mxu0 0.0
  %1648 = vmatpush1.xpose.msra.mxu0 0.0
  %1649 = vmatprep.subr.mxu0 0.0
  %1650 = vmatpush1.xpose.msra.mxu0 0.0
  %1651 = vmatprep.subr.mxu0 0.0
  %1652 = vmatpush1.xpose.msra.mxu0 0.0
  %1653 = vmatprep.subr.mxu0 0.0
  %1654 = vmatpush1.xpose.msra.mxu0 0.0
  %1655 = vmatprep.subr.mxu0 0.0
  %1656 = vmatpush1.xpose.msra.mxu0 0.0
  %1657 = vmatprep.subr.mxu0 0.0
  %1658 = vmatpush1.xpose.msra.mxu0 0.0
  %1659 = vmatprep.subr.mxu0 0.0
  %1660 = vmatpush1.xpose.msra.mxu0 0.0
  %1661 = vmatprep.subr.mxu0 0.0
  %1662 = vmatpush1.xpose.msra.mxu0 0.0
  %1663 = vmatprep.subr.mxu0 0.0
  %1664 = vmatpush1.xpose.msra.mxu0 0.0
  %1665 = vmatprep.subr.mxu0 0.0
  %1666 = vmatpush1.xpose.msra.mxu0 0.0
  %1667 = vmatprep.subr.mxu0 0.0
  %1668 = vmatpush1.xpose.msra.mxu0 0.0
  %1669 = vmatprep.subr.mxu0 0.0
  %1670 = vmatpush1.xpose.msra.mxu0 0.0
  %1671 = vmatprep.subr.mxu0 0.0
  %1672 = vmatpush1.xpose.msra.mxu0 0.0
  %1673 = vmatprep.subr.mxu0 0.0
  %1674 = vmatpush1.xpose.msra.mxu0 0.0
  %1675 = vmatprep.subr.mxu0 0.0
  %1676 = vmatpush1.xpose.msra.mxu0 0.0
  %1677 = vmatprep.subr.mxu0 0.0
  %1678 = vmatpush1.xpose.msra.mxu0 0.0
  %1679 = vmatprep.subr.mxu0 0.0
  %1680 = vmatpush1.xpose.msra.mxu0 0.0
  %1681 = vmatprep.subr.mxu0 0.0
  %1682 = vmatpush1.xpose.msra.mxu0 0.0
  %1683 = vmatprep.subr.mxu0 0.0
  %1684 = vmatpush1.xpose.msra.mxu0 0.0
  %1685 = vmatprep.subr.mxu0 0.0
  %1686 = vmatpush1.xpose.msra.mxu0 0.0
  %1687 = vmatprep.subr.mxu0 0.0
  %1688 = vmatpush1.xpose.msra.mxu0 0.0
  %1689 = vmatprep.subr.mxu0 0.0
  %1690 = vmatpush1.xpose.msra.mxu0 0.0
  %1691 = vmatprep.subr.mxu0 0.0
  %1692 = vmatpush1.xpose.msra.mxu0 0.0
  %1693 = vmatprep.subr.mxu0 0.0
  %1694 = vmatpush1.xpose.msra.mxu0 0.0
  %1695 = vmatprep.subr.mxu0 0.0
  %1696 = vmatpush1.xpose.msra.mxu0 0.0
  %1697 = vmatprep.subr.mxu0 0.0
  %1698 = vmatpush1.xpose.msra.mxu0 0.0
  %1699 = vmatprep.subr.mxu0 0.0
  %1700 = vmatpush1.xpose.msra.mxu0 0.0
  %1701 = vmatprep.subr.mxu0 0.0
  %1702 = vmatpush1.xpose.msra.mxu0 0.0
  %1703 = vmatprep.subr.mxu0 0.0
  %1704 = vmatpush1.xpose.msra.mxu0 0.0
  %1705 = vmatprep.mubr.f32.mxu0 0.0
  %1706 = vmatmul.mubr.f32.gmra.mrb[0].mxu0 %v1636
  %v1707 = vpop.f32.mrb[0].mxu0
  %v1708 = vadd.f32 %v1102, %v1707
  %v1709 = vpop.f32.mrb[0].mxu0
  %1710 = vdwg.mxu0
  %v1711 = vmul.f32 %v1176, 1.442695
  %v1712 = vpow.pop %v1711
  %v1713 = vmul.f32 %v1252, 1.442695
  %v1714 = vpow.pop %v1713
  %v1715 = vmul.f32 %v1328, 1.442695
  %v1716 = vpow.pop %v1715
  %v1717 = vmul.f32 %v1404, 1.442695
  %v1718 = vpow.pop %v1717
  %v1719 = vmul.f32 %v1480, 1.442695
  %v1720 = vpow.pop %v1719
  %v1721 = vmul.f32 %v1556, 1.442695
  %v1722 = vpow.pop %v1721
  %v1723 = vmul.f32 %v1632, 1.442695
  %v1724 = vpow.pop %v1723
  %v1725 = vmul.f32 %v1708, 1.442695
  %v1726 = vpow.pop %v1725
  %vm1727 = vcmask 64512
  %v1728 = vsel %vm1727, %v1712, 0.0
  %1729 = vadd.xlane.f32.xlu0 %v1728
  %v1730 = vpop.xlane.xlu0 %1729
  %v1731 = vsel %vm1727, %v1714, 0.0
  %1732 = vadd.xlane.f32.xlu0 %v1731
  %v1733 = vpop.xlane.xlu0 %1732
  %v1734 = vsel %vm1727, %v1716, 0.0
  %1735 = vadd.xlane.f32.xlu0 %v1734
  %v1736 = vpop.xlane.xlu0 %1735
  %v1737 = vsel %vm1727, %v1718, 0.0
  %1738 = vadd.xlane.f32.xlu0 %v1737
  %v1739 = vpop.xlane.xlu0 %1738
  %v1740 = vsel %vm1727, %v1720, 0.0
  %1741 = vadd.xlane.f32.xlu0 %v1740
  %v1742 = vpop.xlane.xlu0 %1741
  %v1743 = vsel %vm1727, %v1722, 0.0
  %1744 = vadd.xlane.f32.xlu0 %v1743
  %v1745 = vpop.xlane.xlu0 %1744
  %v1746 = vsel %vm1727, %v1724, 0.0
  %1747 = vadd.xlane.f32.xlu0 %v1746
  %v1748 = vpop.xlane.xlu0 %1747
  %v1749 = vsel %vm1727, %v1726, 0.0
  %1750 = vadd.xlane.f32.xlu0 %v1749
  %v1751 = vpop.xlane.xlu0 %1750
  %v1752 = vrcp.pop %v1730
  %v1753 = vmul.f32 %v1712, %v1752
  %v1754 = vrcp.pop %v1733
  %v1755 = vmul.f32 %v1714, %v1754
  %v1756 = vrcp.pop %v1736
  %v1757 = vmul.f32 %v1716, %v1756
  %v1758 = vrcp.pop %v1739
  %v1759 = vmul.f32 %v1718, %v1758
  %v1760 = vrcp.pop %v1742
  %v1761 = vmul.f32 %v1720, %v1760
  %v1762 = vrcp.pop %v1745
  %v1763 = vmul.f32 %v1722, %v1762
  %v1764 = vrcp.pop %v1748
  %v1765 = vmul.f32 %v1724, %v1764
  %v1766 = vrcp.pop %v1751
  %v1767 = vmul.f32 %v1726, %v1766
  %v1769 = vsel %vm1727, %v1753, 0
  %1771 = vmatprep.subr.mxu0 0.0
  %1772 = vmatpush1.msra.mxu0 %v945
  %1773 = vmatprep.subr.mxu0 0.0
  %1774 = vmatpush1.msra.mxu0 0.0
  %1775 = vmatprep.subr.mxu0 0.0
  %1776 = vmatpush1.msra.mxu0 0.0
  %1777 = vmatprep.subr.mxu0 0.0
  %1778 = vmatpush1.msra.mxu0 0.0
  %1779 = vmatprep.subr.mxu0 0.0
  %1780 = vmatpush1.msra.mxu0 0.0
  %1781 = vmatprep.subr.mxu0 0.0
  %1782 = vmatpush1.msra.mxu0 0.0
  %1783 = vmatprep.subr.mxu0 0.0
  %1784 = vmatpush1.msra.mxu0 0.0
  %1785 = vmatprep.subr.mxu0 0.0
  %1786 = vmatpush1.msra.mxu0 0.0
  %1787 = vmatprep.subr.mxu0 0.0
  %1788 = vmatpush1.msra.mxu0 0.0
  %1789 = vmatprep.subr.mxu0 0.0
  %1790 = vmatpush1.msra.mxu0 0.0
  %1791 = vmatprep.subr.mxu0 0.0
  %1792 = vmatpush1.msra.mxu0 0.0
  %1793 = vmatprep.subr.mxu0 0.0
  %1794 = vmatpush1.msra.mxu0 0.0
  %1795 = vmatprep.subr.mxu0 0.0
  %1796 = vmatpush1.msra.mxu0 0.0
  %1797 = vmatprep.subr.mxu0 0.0
  %1798 = vmatpush1.msra.mxu0 0.0
  %1799 = vmatprep.subr.mxu0 0.0
  %1800 = vmatpush1.msra.mxu0 0.0
  %1801 = vmatprep.subr.mxu0 0.0
  %1802 = vmatpush1.msra.mxu0 0.0
  %1803 = vmatprep.subr.mxu0 0.0
  %1804 = vmatpush1.msra.mxu0 0.0
  %1805 = vmatprep.subr.mxu0 0.0
  %1806 = vmatpush1.msra.mxu0 0.0
  %1807 = vmatprep.subr.mxu0 0.0
  %1808 = vmatpush1.msra.mxu0 0.0
  %1809 = vmatprep.subr.mxu0 0.0
  %1810 = vmatpush1.msra.mxu0 0.0
  %1811 = vmatprep.subr.mxu0 0.0
  %1812 = vmatpush1.msra.mxu0 0.0
  %1813 = vmatprep.subr.mxu0 0.0
  %1814 = vmatpush1.msra.mxu0 0.0
  %1815 = vmatprep.subr.mxu0 0.0
  %1816 = vmatpush1.msra.mxu0 0.0
  %1817 = vmatprep.subr.mxu0 0.0
  %1818 = vmatpush1.msra.mxu0 0.0
  %1819 = vmatprep.subr.mxu0 0.0
  %1820 = vmatpush1.msra.mxu0 0.0
  %1821 = vmatprep.subr.mxu0 0.0
  %1822 = vmatpush1.msra.mxu0 0.0
  %1823 = vmatprep.subr.mxu0 0.0
  %1824 = vmatpush1.msra.mxu0 0.0
  %1825 = vmatprep.subr.mxu0 0.0
  %1826 = vmatpush1.msra.mxu0 0.0
  %1827 = vmatprep.subr.mxu0 0.0
  %1828 = vmatpush1.msra.mxu0 0.0
  %1829 = vmatprep.subr.mxu0 0.0
  %1830 = vmatpush1.msra.mxu0 0.0
  %1831 = vmatprep.subr.mxu0 0.0
  %1832 = vmatpush1.msra.mxu0 0.0
  %1833 = vmatprep.subr.mxu0 0.0
  %1834 = vmatpush1.msra.mxu0 0.0
  %1835 = vmatprep.mubr.f32.mxu0 0.0
  %1836 = vmatmul.mubr.f32.gmra.mrb[0].mxu0 %v1769
  %v1837 = vpop.f32.mrb[0].mxu0
  %v1838 = vadd.f32 0.0, %v1837
  %v1839 = vpop.f32.mrb[0].mxu0
  %1840 = vdwg.mxu0
  %v1842 = vsel %vm1727, %v1755, 0
  %1844 = vmatprep.subr.mxu0 0.0
  %1845 = vmatpush1.msra.mxu0 %v946
  %1846 = vmatprep.subr.mxu0 0.0
  %1847 = vmatpush1.msra.mxu0 0.0
  %1848 = vmatprep.subr.mxu0 0.0
  %1849 = vmatpush1.msra.mxu0 0.0
  %1850 = vmatprep.subr.mxu0 0.0
  %1851 = vmatpush1.msra.mxu0 0.0
  %1852 = vmatprep.subr.mxu0 0.0
  %1853 = vmatpush1.msra.mxu0 0.0
  %1854 = vmatprep.subr.mxu0 0.0
  %1855 = vmatpush1.msra.mxu0 0.0
  %1856 = vmatprep.subr.mxu0 0.0
  %1857 = vmatpush1.msra.mxu0 0.0
  %1858 = vmatprep.subr.mxu0 0.0
  %1859 = vmatpush1.msra.mxu0 0.0
  %1860 = vmatprep.subr.mxu0 0.0
  %1861 = vmatpush1.msra.mxu0 0.0
  %1862 = vmatprep.subr.mxu0 0.0
  %1863 = vmatpush1.msra.mxu0 0.0
  %1864 = vmatprep.subr.mxu0 0.0
  %1865 = vmatpush1.msra.mxu0 0.0
  %1866 = vmatprep.subr.mxu0 0.0
  %1867 = vmatpush1.msra.mxu0 0.0
  %1868 = vmatprep.subr.mxu0 0.0
  %1869 = vmatpush1.msra.mxu0 0.0
  %1870 = vmatprep.subr.mxu0 0.0
  %1871 = vmatpush1.msra.mxu0 0.0
  %1872 = vmatprep.subr.mxu0 0.0
  %1873 = vmatpush1.msra.mxu0 0.0
  %1874 = vmatprep.subr.mxu0 0.0
  %1875 = vmatpush1.msra.mxu0 0.0
  %1876 = vmatprep.subr.mxu0 0.0
  %1877 = vmatpush1.msra.mxu0 0.0
  %1878 = vmatprep.subr.mxu0 0.0
  %1879 = vmatpush1.msra.mxu0 0.0
  %1880 = vmatprep.subr.mxu0 0.0
  %1881 = vmatpush1.msra.mxu0 0.0
  %1882 = vmatprep.subr.mxu0 0.0
  %1883 = vmatpush1.msra.mxu0 0.0
  %1884 = vmatprep.subr.mxu0 0.0
  %1885 = vmatpush1.msra.mxu0 0.0
  %1886 = vmatprep.subr.mxu0 0.0
  %1887 = vmatpush1.msra.mxu0 0.0
  %1888 = vmatprep.subr.mxu0 0.0
  %1889 = vmatpush1.msra.mxu0 0.0
  %1890 = vmatprep.subr.mxu0 0.0
  %1891 = vmatpush1.msra.mxu0 0.0
  %1892 = vmatprep.subr.mxu0 0.0
  %1893 = vmatpush1.msra.mxu0 0.0
  %1894 = vmatprep.subr.mxu0 0.0
  %1895 = vmatpush1.msra.mxu0 0.0
  %1896 = vmatprep.subr.mxu0 0.0
  %1897 = vmatpush1.msra.mxu0 0.0
  %1898 = vmatprep.subr.mxu0 0.0
  %1899 = vmatpush1.msra.mxu0 0.0
  %1900 = vmatprep.subr.mxu0 0.0
  %1901 = vmatpush1.msra.mxu0 0.0
  %1902 = vmatprep.subr.mxu0 0.0
  %1903 = vmatpush1.msra.mxu0 0.0
  %1904 = vmatprep.subr.mxu0 0.0
  %1905 = vmatpush1.msra.mxu0 0.0
  %1906 = vmatprep.subr.mxu0 0.0
  %1907 = vmatpush1.msra.mxu0 0.0
  %1908 = vmatprep.mubr.f32.mxu0 0.0
  %1909 = vmatmul.mubr.f32.gmra.mrb[0].mxu0 %v1842
  %v1910 = vpop.f32.mrb[0].mxu0
  %v1911 = vadd.f32 0.0, %v1910
  %v1912 = vpop.f32.mrb[0].mxu0
  %1913 = vdwg.mxu0
  %v1915 = vsel %vm1727, %v1757, 0
  %1917 = vmatprep.subr.mxu0 0.0
  %1918 = vmatpush1.msra.mxu0 %v947
  %1919 = vmatprep.subr.mxu0 0.0
  %1920 = vmatpush1.msra.mxu0 0.0
  %1921 = vmatprep.subr.mxu0 0.0
  %1922 = vmatpush1.msra.mxu0 0.0
  %1923 = vmatprep.subr.mxu0 0.0
  %1924 = vmatpush1.msra.mxu0 0.0
  %1925 = vmatprep.subr.mxu0 0.0
  %1926 = vmatpush1.msra.mxu0 0.0
  %1927 = vmatprep.subr.mxu0 0.0
  %1928 = vmatpush1.msra.mxu0 0.0
  %1929 = vmatprep.subr.mxu0 0.0
  %1930 = vmatpush1.msra.mxu0 0.0
  %1931 = vmatprep.subr.mxu0 0.0
  %1932 = vmatpush1.msra.mxu0 0.0
  %1933 = vmatprep.subr.mxu0 0.0
  %1934 = vmatpush1.msra.mxu0 0.0
  %1935 = vmatprep.subr.mxu0 0.0
  %1936 = vmatpush1.msra.mxu0 0.0
  %1937 = vmatprep.subr.mxu0 0.0
  %1938 = vmatpush1.msra.mxu0 0.0
  %1939 = vmatprep.subr.mxu0 0.0
  %1940 = vmatpush1.msra.mxu0 0.0
  %1941 = vmatprep.subr.mxu0 0.0
  %1942 = vmatpush1.msra.mxu0 0.0
  %1943 = vmatprep.subr.mxu0 0.0
  %1944 = vmatpush1.msra.mxu0 0.0
  %1945 = vmatprep.subr.mxu0 0.0
  %1946 = vmatpush1.msra.mxu0 0.0
  %1947 = vmatprep.subr.mxu0 0.0
  %1948 = vmatpush1.msra.mxu0 0.0
  %1949 = vmatprep.subr.mxu0 0.0
  %1950 = vmatpush1.msra.mxu0 0.0
  %1951 = vmatprep.subr.mxu0 0.0
  %1952 = vmatpush1.msra.mxu0 0.0
  %1953 = vmatprep.subr.mxu0 0.0
  %1954 = vmatpush1.msra.mxu0 0.0
  %1955 = vmatprep.subr.mxu0 0.0
  %1956 = vmatpush1.msra.mxu0 0.0
  %1957 = vmatprep.subr.mxu0 0.0
  %1958 = vmatpush1.msra.mxu0 0.0
  %1959 = vmatprep.subr.mxu0 0.0
  %1960 = vmatpush1.msra.mxu0 0.0
  %1961 = vmatprep.subr.mxu0 0.0
  %1962 = vmatpush1.msra.mxu0 0.0
  %1963 = vmatprep.subr.mxu0 0.0
  %1964 = vmatpush1.msra.mxu0 0.0
  %1965 = vmatprep.subr.mxu0 0.0
  %1966 = vmatpush1.msra.mxu0 0.0
  %1967 = vmatprep.subr.mxu0 0.0
  %1968 = vmatpush1.msra.mxu0 0.0
  %1969 = vmatprep.subr.mxu0 0.0
  %1970 = vmatpush1.msra.mxu0 0.0
  %1971 = vmatprep.subr.mxu0 0.0
  %1972 = vmatpush1.msra.mxu0 0.0
  %1973 = vmatprep.subr.mxu0 0.0
  %1974 = vmatpush1.msra.mxu0 0.0
  %1975 = vmatprep.subr.mxu0 0.0
  %1976 = vmatpush1.msra.mxu0 0.0
  %1977 = vmatprep.subr.mxu0 0.0
  %1978 = vmatpush1.msra.mxu0 0.0
  %1979 = vmatprep.subr.mxu0 0.0
  %1980 = vmatpush1.msra.mxu0 0.0
  %1981 = vmatprep.mubr.f32.mxu0 0.0
  %1982 = vmatmul.mubr.f32.gmra.mrb[0].mxu0 %v1915
  %v1983 = vpop.f32.mrb[0].mxu0
  %v1984 = vadd.f32 0.0, %v1983
  %v1985 = vpop.f32.mrb[0].mxu0
  %1986 = vdwg.mxu0
  %v1988 = vsel %vm1727, %v1759, 0
  %1990 = vmatprep.subr.mxu0 0.0
  %1991 = vmatpush1.msra.mxu0 %v948
  %1992 = vmatprep.subr.mxu0 0.0
  %1993 = vmatpush1.msra.mxu0 0.0
  %1994 = vmatprep.subr.mxu0 0.0
  %1995 = vmatpush1.msra.mxu0 0.0
  %1996 = vmatprep.subr.mxu0 0.0
  %1997 = vmatpush1.msra.mxu0 0.0
  %1998 = vmatprep.subr.mxu0 0.0
  %1999 = vmatpush1.msra.mxu0 0.0
  %2000 = vmatprep.subr.mxu0 0.0
  %2001 = vmatpush1.msra.mxu0 0.0
  %2002 = vmatprep.subr.mxu0 0.0
  %2003 = vmatpush1.msra.mxu0 0.0
  %2004 = vmatprep.subr.mxu0 0.0
  %2005 = vmatpush1.msra.mxu0 0.0
  %2006 = vmatprep.subr.mxu0 0.0
  %2007 = vmatpush1.msra.mxu0 0.0
  %2008 = vmatprep.subr.mxu0 0.0
  %2009 = vmatpush1.msra.mxu0 0.0
  %2010 = vmatprep.subr.mxu0 0.0
  %2011 = vmatpush1.msra.mxu0 0.0
  %2012 = vmatprep.subr.mxu0 0.0
  %2013 = vmatpush1.msra.mxu0 0.0
  %2014 = vmatprep.subr.mxu0 0.0
  %2015 = vmatpush1.msra.mxu0 0.0
  %2016 = vmatprep.subr.mxu0 0.0
  %2017 = vmatpush1.msra.mxu0 0.0
  %2018 = vmatprep.subr.mxu0 0.0
  %2019 = vmatpush1.msra.mxu0 0.0
  %2020 = vmatprep.subr.mxu0 0.0
  %2021 = vmatpush1.msra.mxu0 0.0
  %2022 = vmatprep.subr.mxu0 0.0
  %2023 = vmatpush1.msra.mxu0 0.0
  %2024 = vmatprep.subr.mxu0 0.0
  %2025 = vmatpush1.msra.mxu0 0.0
  %2026 = vmatprep.subr.mxu0 0.0
  %2027 = vmatpush1.msra.mxu0 0.0
  %2028 = vmatprep.subr.mxu0 0.0
  %2029 = vmatpush1.msra.mxu0 0.0
  %2030 = vmatprep.subr.mxu0 0.0
  %2031 = vmatpush1.msra.mxu0 0.0
  %2032 = vmatprep.subr.mxu0 0.0
  %2033 = vmatpush1.msra.mxu0 0.0
  %2034 = vmatprep.subr.mxu0 0.0
  %2035 = vmatpush1.msra.mxu0 0.0
  %2036 = vmatprep.subr.mxu0 0.0
  %2037 = vmatpush1.msra.mxu0 0.0
  %2038 = vmatprep.subr.mxu0 0.0
  %2039 = vmatpush1.msra.mxu0 0.0
  %2040 = vmatprep.subr.mxu0 0.0
  %2041 = vmatpush1.msra.mxu0 0.0
  %2042 = vmatprep.subr.mxu0 0.0
  %2043 = vmatpush1.msra.mxu0 0.0
  %2044 = vmatprep.subr.mxu0 0.0
  %2045 = vmatpush1.msra.mxu0 0.0
  %2046 = vmatprep.subr.mxu0 0.0
  %2047 = vmatpush1.msra.mxu0 0.0
  %2048 = vmatprep.subr.mxu0 0.0
  %2049 = vmatpush1.msra.mxu0 0.0
  %2050 = vmatprep.subr.mxu0 0.0
  %2051 = vmatpush1.msra.mxu0 0.0
  %2052 = vmatprep.subr.mxu0 0.0
  %2053 = vmatpush1.msra.mxu0 0.0
  %2054 = vmatprep.mubr.f32.mxu0 0.0
  %2055 = vmatmul.mubr.f32.gmra.mrb[0].mxu0 %v1988
  %v2056 = vpop.f32.mrb[0].mxu0
  %v2057 = vadd.f32 0.0, %v2056
  %v2058 = vpop.f32.mrb[0].mxu0
  %2059 = vdwg.mxu0
  %v2061 = vsel %vm1727, %v1761, 0
  %2063 = vmatprep.subr.mxu0 0.0
  %2064 = vmatpush1.msra.mxu0 %v1091
  %2065 = vmatprep.subr.mxu0 0.0
  %2066 = vmatpush1.msra.mxu0 0.0
  %2067 = vmatprep.subr.mxu0 0.0
  %2068 = vmatpush1.msra.mxu0 0.0
  %2069 = vmatprep.subr.mxu0 0.0
  %2070 = vmatpush1.msra.mxu0 0.0
  %2071 = vmatprep.subr.mxu0 0.0
  %2072 = vmatpush1.msra.mxu0 0.0
  %2073 = vmatprep.subr.mxu0 0.0
  %2074 = vmatpush1.msra.mxu0 0.0
  %2075 = vmatprep.subr.mxu0 0.0
  %2076 = vmatpush1.msra.mxu0 0.0
  %2077 = vmatprep.subr.mxu0 0.0
  %2078 = vmatpush1.msra.mxu0 0.0
  %2079 = vmatprep.subr.mxu0 0.0
  %2080 = vmatpush1.msra.mxu0 0.0
  %2081 = vmatprep.subr.mxu0 0.0
  %2082 = vmatpush1.msra.mxu0 0.0
  %2083 = vmatprep.subr.mxu0 0.0
  %2084 = vmatpush1.msra.mxu0 0.0
  %2085 = vmatprep.subr.mxu0 0.0
  %2086 = vmatpush1.msra.mxu0 0.0
  %2087 = vmatprep.subr.mxu0 0.0
  %2088 = vmatpush1.msra.mxu0 0.0
  %2089 = vmatprep.subr.mxu0 0.0
  %2090 = vmatpush1.msra.mxu0 0.0
  %2091 = vmatprep.subr.mxu0 0.0
  %2092 = vmatpush1.msra.mxu0 0.0
  %2093 = vmatprep.subr.mxu0 0.0
  %2094 = vmatpush1.msra.mxu0 0.0
  %2095 = vmatprep.subr.mxu0 0.0
  %2096 = vmatpush1.msra.mxu0 0.0
  %2097 = vmatprep.subr.mxu0 0.0
  %2098 = vmatpush1.msra.mxu0 0.0
  %2099 = vmatprep.subr.mxu0 0.0
  %2100 = vmatpush1.msra.mxu0 0.0
  %2101 = vmatprep.subr.mxu0 0.0
  %2102 = vmatpush1.msra.mxu0 0.0
  %2103 = vmatprep.subr.mxu0 0.0
  %2104 = vmatpush1.msra.mxu0 0.0
  %2105 = vmatprep.subr.mxu0 0.0
  %2106 = vmatpush1.msra.mxu0 0.0
  %2107 = vmatprep.subr.mxu0 0.0
  %2108 = vmatpush1.msra.mxu0 0.0
  %2109 = vmatprep.subr.mxu0 0.0
  %2110 = vmatpush1.msra.mxu0 0.0
  %2111 = vmatprep.subr.mxu0 0.0
  %2112 = vmatpush1.msra.mxu0 0.0
  %2113 = vmatprep.subr.mxu0 0.0
  %2114 = vmatpush1.msra.mxu0 0.0
  %2115 = vmatprep.subr.mxu0 0.0
  %2116 = vmatpush1.msra.mxu0 0.0
  %2117 = vmatprep.subr.mxu0 0.0
  %2118 = vmatpush1.msra.mxu0 0.0
  %2119 = vmatprep.subr.mxu0 0.0
  %2120 = vmatpush1.msra.mxu0 0.0
  %2121 = vmatprep.subr.mxu0 0.0
  %2122 = vmatpush1.msra.mxu0 0.0
  %2123 = vmatprep.subr.mxu0 0.0
  %2124 = vmatpush1.msra.mxu0 0.0
  %2125 = vmatprep.subr.mxu0 0.0
  %2126 = vmatpush1.msra.mxu0 0.0
  %2127 = vmatprep.mubr.f32.mxu0 0.0
  %2128 = vmatmul.mubr.f32.gmra.mrb[0].mxu0 %v2061
  %v2129 = vpop.f32.mrb[0].mxu0
  %v2130 = vadd.f32 0.0, %v2129
  %v2131 = vpop.f32.mrb[0].mxu0
  %2132 = vdwg.mxu0
  %v2134 = vsel %vm1727, %v1763, 0
  %2136 = vmatprep.subr.mxu0 0.0
  %2137 = vmatpush1.msra.mxu0 %v1092
  %2138 = vmatprep.subr.mxu0 0.0
  %2139 = vmatpush1.msra.mxu0 0.0
  %2140 = vmatprep.subr.mxu0 0.0
  %2141 = vmatpush1.msra.mxu0 0.0
  %2142 = vmatprep.subr.mxu0 0.0
  %2143 = vmatpush1.msra.mxu0 0.0
  %2144 = vmatprep.subr.mxu0 0.0
  %2145 = vmatpush1.msra.mxu0 0.0
  %2146 = vmatprep.subr.mxu0 0.0
  %2147 = vmatpush1.msra.mxu0 0.0
  %2148 = vmatprep.subr.mxu0 0.0
  %2149 = vmatpush1.msra.mxu0 0.0
  %2150 = vmatprep.subr.mxu0 0.0
  %2151 = vmatpush1.msra.mxu0 0.0
  %2152 = vmatprep.subr.mxu0 0.0
  %2153 = vmatpush1.msra.mxu0 0.0
  %2154 = vmatprep.subr.mxu0 0.0
  %2155 = vmatpush1.msra.mxu0 0.0
  %2156 = vmatprep.subr.mxu0 0.0
  %2157 = vmatpush1.msra.mxu0 0.0
  %2158 = vmatprep.subr.mxu0 0.0
  %2159 = vmatpush1.msra.mxu0 0.0
  %2160 = vmatprep.subr.mxu0 0.0
  %2161 = vmatpush1.msra.mxu0 0.0
  %2162 = vmatprep.subr.mxu0 0.0
  %2163 = vmatpush1.msra.mxu0 0.0
  %2164 = vmatprep.subr.mxu0 0.0
  %2165 = vmatpush1.msra.mxu0 0.0
  %2166 = vmatprep.subr.mxu0 0.0
  %2167 = vmatpush1.msra.mxu0 0.0
  %2168 = vmatprep.subr.mxu0 0.0
  %2169 = vmatpush1.msra.mxu0 0.0
  %2170 = vmatprep.subr.mxu0 0.0
  %2171 = vmatpush1.msra.mxu0 0.0
  %2172 = vmatprep.subr.mxu0 0.0
  %2173 = vmatpush1.msra.mxu0 0.0
  %2174 = vmatprep.subr.mxu0 0.0
  %2175 = vmatpush1.msra.mxu0 0.0
  %2176 = vmatprep.subr.mxu0 0.0
  %2177 = vmatpush1.msra.mxu0 0.0
  %2178 = vmatprep.subr.mxu0 0.0
  %2179 = vmatpush1.msra.mxu0 0.0
  %2180 = vmatprep.subr.mxu0 0.0
  %2181 = vmatpush1.msra.mxu0 0.0
  %2182 = vmatprep.subr.mxu0 0.0
  %2183 = vmatpush1.msra.mxu0 0.0
  %2184 = vmatprep.subr.mxu0 0.0
  %2185 = vmatpush1.msra.mxu0 0.0
  %2186 = vmatprep.subr.mxu0 0.0
  %2187 = vmatpush1.msra.mxu0 0.0
  %2188 = vmatprep.subr.mxu0 0.0
  %2189 = vmatpush1.msra.mxu0 0.0
  %2190 = vmatprep.subr.mxu0 0.0
  %2191 = vmatpush1.msra.mxu0 0.0
  %2192 = vmatprep.subr.mxu0 0.0
  %2193 = vmatpush1.msra.mxu0 0.0
  %2194 = vmatprep.subr.mxu0 0.0
  %2195 = vmatpush1.msra.mxu0 0.0
  %2196 = vmatprep.subr.mxu0 0.0
  %2197 = vmatpush1.msra.mxu0 0.0
  %2198 = vmatprep.subr.mxu0 0.0
  %2199 = vmatpush1.msra.mxu0 0.0
  %2200 = vmatprep.mubr.f32.mxu0 0.0
  %2201 = vmatmul.mubr.f32.gmra.mrb[0].mxu0 %v2134
  %v2202 = vpop.f32.mrb[0].mxu0
  %v2203 = vadd.f32 0.0, %v2202
  %v2204 = vpop.f32.mrb[0].mxu0
  %2205 = vdwg.mxu0
  %v2207 = vsel %vm1727, %v1765, 0
  %2209 = vmatprep.subr.mxu0 0.0
  %2210 = vmatpush1.msra.mxu0 %v1093
  %2211 = vmatprep.subr.mxu0 0.0
  %2212 = vmatpush1.msra.mxu0 0.0
  %2213 = vmatprep.subr.mxu0 0.0
  %2214 = vmatpush1.msra.mxu0 0.0
  %2215 = vmatprep.subr.mxu0 0.0
  %2216 = vmatpush1.msra.mxu0 0.0
  %2217 = vmatprep.subr.mxu0 0.0
  %2218 = vmatpush1.msra.mxu0 0.0
  %2219 = vmatprep.subr.mxu0 0.0
  %2220 = vmatpush1.msra.mxu0 0.0
  %2221 = vmatprep.subr.mxu0 0.0
  %2222 = vmatpush1.msra.mxu0 0.0
  %2223 = vmatprep.subr.mxu0 0.0
  %2224 = vmatpush1.msra.mxu0 0.0
  %2225 = vmatprep.subr.mxu0 0.0
  %2226 = vmatpush1.msra.mxu0 0.0
  %2227 = vmatprep.subr.mxu0 0.0
  %2228 = vmatpush1.msra.mxu0 0.0
  %2229 = vmatprep.subr.mxu0 0.0
  %2230 = vmatpush1.msra.mxu0 0.0
  %2231 = vmatprep.subr.mxu0 0.0
  %2232 = vmatpush1.msra.mxu0 0.0
  %2233 = vmatprep.subr.mxu0 0.0
  %2234 = vmatpush1.msra.mxu0 0.0
  %2235 = vmatprep.subr.mxu0 0.0
  %2236 = vmatpush1.msra.mxu0 0.0
  %2237 = vmatprep.subr.mxu0 0.0
  %2238 = vmatpush1.msra.mxu0 0.0
  %2239 = vmatprep.subr.mxu0 0.0
  %2240 = vmatpush1.msra.mxu0 0.0
  %2241 = vmatprep.subr.mxu0 0.0
  %2242 = vmatpush1.msra.mxu0 0.0
  %2243 = vmatprep.subr.mxu0 0.0
  %2244 = vmatpush1.msra.mxu0 0.0
  %2245 = vmatprep.subr.mxu0 0.0
  %2246 = vmatpush1.msra.mxu0 0.0
  %2247 = vmatprep.subr.mxu0 0.0
  %2248 = vmatpush1.msra.mxu0 0.0
  %2249 = vmatprep.subr.mxu0 0.0
  %2250 = vmatpush1.msra.mxu0 0.0
  %2251 = vmatprep.subr.mxu0 0.0
  %2252 = vmatpush1.msra.mxu0 0.0
  %2253 = vmatprep.subr.mxu0 0.0
  %2254 = vmatpush1.msra.mxu0 0.0
  %2255 = vmatprep.subr.mxu0 0.0
  %2256 = vmatpush1.msra.mxu0 0.0
  %2257 = vmatprep.subr.mxu0 0.0
  %2258 = vmatpush1.msra.mxu0 0.0
  %2259 = vmatprep.subr.mxu0 0.0
  %2260 = vmatpush1.msra.mxu0 0.0
  %2261 = vmatprep.subr.mxu0 0.0
  %2262 = vmatpush1.msra.mxu0 0.0
  %2263 = vmatprep.subr.mxu0 0.0
  %2264 = vmatpush1.msra.mxu0 0.0
  %2265 = vmatprep.subr.mxu0 0.0
  %2266 = vmatpush1.msra.mxu0 0.0
  %2267 = vmatprep.subr.mxu0 0.0
  %2268 = vmatpush1.msra.mxu0 0.0
  %2269 = vmatprep.subr.mxu0 0.0
  %2270 = vmatpush1.msra.mxu0 0.0
  %2271 = vmatprep.subr.mxu0 0.0
  %2272 = vmatpush1.msra.mxu0 0.0
  %2273 = vmatprep.mubr.f32.mxu0 0.0
  %2274 = vmatmul.mubr.f32.gmra.mrb[0].mxu0 %v2207
  %v2275 = vpop.f32.mrb[0].mxu0
  %v2276 = vadd.f32 0.0, %v2275
  %v2277 = vpop.f32.mrb[0].mxu0
  %2278 = vdwg.mxu0
  %v2280 = vsel %vm1727, %v1767, 0
  %2282 = vmatprep.subr.mxu0 0.0
  %2283 = vmatpush1.msra.mxu0 %v1094
  %2284 = vmatprep.subr.mxu0 0.0
  %2285 = vmatpush1.msra.mxu0 0.0
  %2286 = vmatprep.subr.mxu0 0.0
  %2287 = vmatpush1.msra.mxu0 0.0
  %2288 = vmatprep.subr.mxu0 0.0
  %2289 = vmatpush1.msra.mxu0 0.0
  %2290 = vmatprep.subr.mxu0 0.0
  %2291 = vmatpush1.msra.mxu0 0.0
  %2292 = vmatprep.subr.mxu0 0.0
  %2293 = vmatpush1.msra.mxu0 0.0
  %2294 = vmatprep.subr.mxu0 0.0
  %2295 = vmatpush1.msra.mxu0 0.0
  %2296 = vmatprep.subr.mxu0 0.0
  %2297 = vmatpush1.msra.mxu0 0.0
  %2298 = vmatprep.subr.mxu0 0.0
  %2299 = vmatpush1.msra.mxu0 0.0
  %2300 = vmatprep.subr.mxu0 0.0
  %2301 = vmatpush1.msra.mxu0 0.0
  %2302 = vmatprep.subr.mxu0 0.0
  %2303 = vmatpush1.msra.mxu0 0.0
  %2304 = vmatprep.subr.mxu0 0.0
  %2305 = vmatpush1.msra.mxu0 0.0
  %2306 = vmatprep.subr.mxu0 0.0
  %2307 = vmatpush1.msra.mxu0 0.0
  %2308 = vmatprep.subr.mxu0 0.0
  %2309 = vmatpush1.msra.mxu0 0.0
  %2310 = vmatprep.subr.mxu0 0.0
  %2311 = vmatpush1.msra.mxu0 0.0
  %2312 = vmatprep.subr.mxu0 0.0
  %2313 = vmatpush1.msra.mxu0 0.0
  %2314 = vmatprep.subr.mxu0 0.0
  %2315 = vmatpush1.msra.mxu0 0.0
  %2316 = vmatprep.subr.mxu0 0.0
  %2317 = vmatpush1.msra.mxu0 0.0
  %2318 = vmatprep.subr.mxu0 0.0
  %2319 = vmatpush1.msra.mxu0 0.0
  %2320 = vmatprep.subr.mxu0 0.0
  %2321 = vmatpush1.msra.mxu0 0.0
  %2322 = vmatprep.subr.mxu0 0.0
  %2323 = vmatpush1.msra.mxu0 0.0
  %2324 = vmatprep.subr.mxu0 0.0
  %2325 = vmatpush1.msra.mxu0 0.0
  %2326 = vmatprep.subr.mxu0 0.0
  %2327 = vmatpush1.msra.mxu0 0.0
  %2328 = vmatprep.subr.mxu0 0.0
  %2329 = vmatpush1.msra.mxu0 0.0
  %2330 = vmatprep.subr.mxu0 0.0
  %2331 = vmatpush1.msra.mxu0 0.0
  %2332 = vmatprep.subr.mxu0 0.0
  %2333 = vmatpush1.msra.mxu0 0.0
  %2334 = vmatprep.subr.mxu0 0.0
  %2335 = vmatpush1.msra.mxu0 0.0
  %2336 = vmatprep.subr.mxu0 0.0
  %2337 = vmatpush1.msra.mxu0 0.0
  %2338 = vmatprep.subr.mxu0 0.0
  %2339 = vmatpush1.msra.mxu0 0.0
  %2340 = vmatprep.subr.mxu0 0.0
  %2341 = vmatpush1.msra.mxu0 0.0
  %2342 = vmatprep.subr.mxu0 0.0
  %2343 = vmatpush1.msra.mxu0 0.0
  %2344 = vmatprep.subr.mxu0 0.0
  %2345 = vmatpush1.msra.mxu0 0.0
  %2346 = vmatprep.mubr.f32.mxu0 0.0
  %2347 = vmatmul.mubr.f32.gmra.mrb[0].mxu0 %v2280
  %v2348 = vpop.f32.mrb[0].mxu0
  %v2349 = vadd.f32 0.0, %v2348
  %v2350 = vpop.f32.mrb[0].mxu0
  %2351 = vdwg.mxu0
  %v2352 = vcombine.low %v1838, %v1984
  %v2353 = vcombine.high %v1838, %v1984
  %v2355 = vunpack.c.l.s4 1983009808
  %v2356 = vunpack.c.0.s8 %v2355
  %v2357 = vlaneseq
  %v2358 = vshrl.u32 %v2357, 7
  %v2359 = vsub.s32 %v2356, %v2358
  %v2360 = vrot.slane %v2352, %v2359
  %v2362 = vunpack.c.l.s4 1983009808
  %v2363 = vunpack.c.0.s8 %v2362
  %v2364 = vlaneseq
  %v2365 = vshrl.u32 %v2364, 7
  %v2366 = vsub.s32 %v2363, %v2365
  %v2367 = vrot.slane %v2353, %v2366
  %v2368 = vcombine.low %v1911, %v2057
  %v2369 = vcombine.high %v1911, %v2057
  %v2371 = vunpack.c.l.s4 1983009808
  %v2372 = vunpack.c.0.s8 %v2371
  %v2373 = vlaneseq
  %v2374 = vshrl.u32 %v2373, 7
  %v2375 = vsub.s32 %v2372, %v2374
  %v2376 = vrot.slane %v2368, %v2375
  %v2378 = vunpack.c.l.s4 1983009808
  %v2379 = vunpack.c.0.s8 %v2378
  %v2380 = vlaneseq
  %v2381 = vshrl.u32 %v2380, 7
  %v2382 = vsub.s32 %v2379, %v2381
  %v2383 = vrot.slane %v2369, %v2382
  %v2384 = vcombine.low %v2360, %v2376
  %v2385 = vcombine.high %v2360, %v2376
  %v2387 = vunpack.c.l.s4 1934713408
  %v2388 = vunpack.c.0.s8 %v2387
  %v2389 = vlaneseq
  %v2390 = vshrl.u32 %v2389, 7
  %v2391 = vsub.s32 %v2388, %v2390
  %v2392 = vrot.slane %v2384, %v2391
  %v2394 = vunpack.c.l.s4 1934713408
  %v2395 = vunpack.c.0.s8 %v2394
  %v2396 = vlaneseq
  %v2397 = vshrl.u32 %v2396, 7
  %v2398 = vsub.s32 %v2395, %v2397
  %v2399 = vrot.slane %v2385, %v2398
  %v2400 = vcombine.low %v2367, %v2383
  %v2401 = vcombine.high %v2367, %v2383
  %v2403 = vunpack.c.l.s4 1934713408
  %v2404 = vunpack.c.0.s8 %v2403
  %v2405 = vlaneseq
  %v2406 = vshrl.u32 %v2405, 7
  %v2407 = vsub.s32 %v2404, %v2406
  %v2408 = vrot.slane %v2400, %v2407
  %v2410 = vunpack.c.l.s4 1934713408
  %v2411 = vunpack.c.0.s8 %v2410
  %v2412 = vlaneseq
  %v2413 = vshrl.u32 %v2412, 7
  %v2414 = vsub.s32 %v2411, %v2413
  %v2415 = vrot.slane %v2401, %v2414
  %v2416 = vcombine.high %v2392, 0.0
  %v2417 = vcombine.high %v2399, 0.0
  %v2418 = vcombine.high %v2408, 0.0
  %v2419 = vcombine.high %v2415, 0.0
  %v2420 = vcombine.low %v2392, %v2399
  %v2422 = vunpack.c.l.s4 1983009808
  %v2423 = vunpack.c.0.s8 %v2422
  %v2424 = vlaneseq
  %v2425 = vshrl.u32 %v2424, 7
  %v2426 = vsub.s32 %v2423, %v2425
  %v2427 = vrot.slane %v2420, %v2426
  %v2428 = vcombine.low %v2416, %v2417
  %v2430 = vunpack.c.l.s4 1983009808
  %v2431 = vunpack.c.0.s8 %v2430
  %v2432 = vlaneseq
  %v2433 = vshrl.u32 %v2432, 7
  %v2434 = vsub.s32 %v2431, %v2433
  %v2435 = vrot.slane %v2428, %v2434
  %v2436 = vcombine.low %v2408, %v2415
  %v2438 = vunpack.c.l.s4 1983009808
  %v2439 = vunpack.c.0.s8 %v2438
  %v2440 = vlaneseq
  %v2441 = vshrl.u32 %v2440, 7
  %v2442 = vsub.s32 %v2439, %v2441
  %v2443 = vrot.slane %v2436, %v2442
  %v2444 = vcombine.low %v2418, %v2419
  %v2446 = vunpack.c.l.s4 1983009808
  %v2447 = vunpack.c.0.s8 %v2446
  %v2448 = vlaneseq
  %v2449 = vshrl.u32 %v2448, 7
  %v2450 = vsub.s32 %v2447, %v2449
  %v2451 = vrot.slane %v2444, %v2450
  %v2452 = vcombine.low %v2427, %v2435
  %v2453 = vcombine.high %v2427, %v2435
  %v2455 = vunpack.c.l.s4 1934713408
  %v2456 = vunpack.c.0.s8 %v2455
  %v2457 = vlaneseq
  %v2458 = vshrl.u32 %v2457, 7
  %v2459 = vsub.s32 %v2456, %v2458
  %v2460 = vrot.slane %v2452, %v2459
  %v2462 = vunpack.c.l.s4 1934713408
  %v2463 = vunpack.c.0.s8 %v2462
  %v2464 = vlaneseq
  %v2465 = vshrl.u32 %v2464, 7
  %v2466 = vsub.s32 %v2463, %v2465
  %v2467 = vrot.slane %v2453, %v2466
  %v2468 = vcombine.low %v2443, %v2451
  %v2469 = vcombine.high %v2443, %v2451
  %v2471 = vunpack.c.l.s4 1934713408
  %v2472 = vunpack.c.0.s8 %v2471
  %v2473 = vlaneseq
  %v2474 = vshrl.u32 %v2473, 7
  %v2475 = vsub.s32 %v2472, %v2474
  %v2476 = vrot.slane %v2468, %v2475
  %v2478 = vunpack.c.l.s4 1934713408
  %v2479 = vunpack.c.0.s8 %v2478
  %v2480 = vlaneseq
  %v2481 = vshrl.u32 %v2480, 7
  %v2482 = vsub.s32 %v2479, %v2481
  %v2483 = vrot.slane %v2469, %v2482
  %v2484 = vcombine.low %v2460, %v2476
  %v2485 = vcombine.high %v2460, %v2476
  %v2486 = vcombine.low %v2467, %v2483
  %v2487 = vcombine.high %v2467, %v2483
  %2489 = vrot.lane.b32.xlu0 %v2485, 32
  %v2490 = vpop.permute.xlu0 %2489
  %2493 = vrot.lane.b32.xlu0 %v2486, 64
  %v2494 = vpop.permute.xlu0 %2493
  %2497 = vrot.lane.b32.xlu0 %v2487, 96
  %v2498 = vpop.permute.xlu0 %2497
  %v2500 = vsel %vm60, %v2484, %v2490
  %vm2501 = vcmask 523264
  %v2502 = vsel %vm2501, %v2500, %v2494
  %vm2503 = vcmask 785408
  %v2504 = vsel %vm2503, %v2502, %v2498
  %v2505 = vcombine.low %v2130, %v2276
  %v2506 = vcombine.high %v2130, %v2276
  %v2508 = vunpack.c.l.s4 1983009808
  %v2509 = vunpack.c.0.s8 %v2508
  %v2510 = vlaneseq
  %v2511 = vshrl.u32 %v2510, 7
  %v2512 = vsub.s32 %v2509, %v2511
  %v2513 = vrot.slane %v2505, %v2512
  %v2515 = vunpack.c.l.s4 1983009808
  %v2516 = vunpack.c.0.s8 %v2515
  %v2517 = vlaneseq
  %v2518 = vshrl.u32 %v2517, 7
  %v2519 = vsub.s32 %v2516, %v2518
  %v2520 = vrot.slane %v2506, %v2519
  %v2521 = vcombine.low %v2203, %v2349
  %v2522 = vcombine.high %v2203, %v2349
  %v2524 = vunpack.c.l.s4 1983009808
  %v2525 = vunpack.c.0.s8 %v2524
  %v2526 = vlaneseq
  %v2527 = vshrl.u32 %v2526, 7
  %v2528 = vsub.s32 %v2525, %v2527
  %v2529 = vrot.slane %v2521, %v2528
  %v2531 = vunpack.c.l.s4 1983009808
  %v2532 = vunpack.c.0.s8 %v2531
  %v2533 = vlaneseq
  %v2534 = vshrl.u32 %v2533, 7
  %v2535 = vsub.s32 %v2532, %v2534
  %v2536 = vrot.slane %v2522, %v2535
  %v2537 = vcombine.low %v2513, %v2529
  %v2538 = vcombine.high %v2513, %v2529
  %v2540 = vunpack.c.l.s4 1934713408
  %v2541 = vunpack.c.0.s8 %v2540
  %v2542 = vlaneseq
  %v2543 = vshrl.u32 %v2542, 7
  %v2544 = vsub.s32 %v2541, %v2543
  %v2545 = vrot.slane %v2537, %v2544
  %v2547 = vunpack.c.l.s4 1934713408
  %v2548 = vunpack.c.0.s8 %v2547
  %v2549 = vlaneseq
  %v2550 = vshrl.u32 %v2549, 7
  %v2551 = vsub.s32 %v2548, %v2550
  %v2552 = vrot.slane %v2538, %v2551
  %v2553 = vcombine.low %v2520, %v2536
  %v2554 = vcombine.high %v2520, %v2536
  %v2556 = vunpack.c.l.s4 1934713408
  %v2557 = vunpack.c.0.s8 %v2556
  %v2558 = vlaneseq
  %v2559 = vshrl.u32 %v2558, 7
  %v2560 = vsub.s32 %v2557, %v2559
  %v2561 = vrot.slane %v2553, %v2560
  %v2563 = vunpack.c.l.s4 1934713408
  %v2564 = vunpack.c.0.s8 %v2563
  %v2565 = vlaneseq
  %v2566 = vshrl.u32 %v2565, 7
  %v2567 = vsub.s32 %v2564, %v2566
  %v2568 = vrot.slane %v2554, %v2567
  %v2569 = vcombine.high %v2545, 0.0
  %v2570 = vcombine.high %v2552, 0.0
  %v2571 = vcombine.high %v2561, 0.0
  %v2572 = vcombine.high %v2568, 0.0
  %v2573 = vcombine.low %v2545, %v2552
  %v2575 = vunpack.c.l.s4 1983009808
  %v2576 = vunpack.c.0.s8 %v2575
  %v2577 = vlaneseq
  %v2578 = vshrl.u32 %v2577, 7
  %v2579 = vsub.s32 %v2576, %v2578
  %v2580 = vrot.slane %v2573, %v2579
  %v2581 = vcombine.low %v2569, %v2570
  %v2583 = vunpack.c.l.s4 1983009808
  %v2584 = vunpack.c.0.s8 %v2583
  %v2585 = vlaneseq
  %v2586 = vshrl.u32 %v2585, 7
  %v2587 = vsub.s32 %v2584, %v2586
  %v2588 = vrot.slane %v2581, %v2587
  %v2589 = vcombine.low %v2561, %v2568
  %v2591 = vunpack.c.l.s4 1983009808
  %v2592 = vunpack.c.0.s8 %v2591
  %v2593 = vlaneseq
  %v2594 = vshrl.u32 %v2593, 7
  %v2595 = vsub.s32 %v2592, %v2594
  %v2596 = vrot.slane %v2589, %v2595
  %v2597 = vcombine.low %v2571, %v2572
  %v2599 = vunpack.c.l.s4 1983009808
  %v2600 = vunpack.c.0.s8 %v2599
  %v2601 = vlaneseq
  %v2602 = vshrl.u32 %v2601, 7
  %v2603 = vsub.s32 %v2600, %v2602
  %v2604 = vrot.slane %v2597, %v2603
  %v2605 = vcombine.low %v2580, %v2588
  %v2606 = vcombine.high %v2580, %v2588
  %v2608 = vunpack.c.l.s4 1934713408
  %v2609 = vunpack.c.0.s8 %v2608
  %v2610 = vlaneseq
  %v2611 = vshrl.u32 %v2610, 7
  %v2612 = vsub.s32 %v2609, %v2611
  %v2613 = vrot.slane %v2605, %v2612
  %v2615 = vunpack.c.l.s4 1934713408
  %v2616 = vunpack.c.0.s8 %v2615
  %v2617 = vlaneseq
  %v2618 = vshrl.u32 %v2617, 7
  %v2619 = vsub.s32 %v2616, %v2618
  %v2620 = vrot.slane %v2606, %v2619
  %v2621 = vcombine.low %v2596, %v2604
  %v2622 = vcombine.high %v2596, %v2604
  %v2624 = vunpack.c.l.s4 1934713408
  %v2625 = vunpack.c.0.s8 %v2624
  %v2626 = vlaneseq
  %v2627 = vshrl.u32 %v2626, 7
  %v2628 = vsub.s32 %v2625, %v2627
  %v2629 = vrot.slane %v2621, %v2628
  %v2631 = vunpack.c.l.s4 1934713408
  %v2632 = vunpack.c.0.s8 %v2631
  %v2633 = vlaneseq
  %v2634 = vshrl.u32 %v2633, 7
  %v2635 = vsub.s32 %v2632, %v2634
  %v2636 = vrot.slane %v2622, %v2635
  %v2637 = vcombine.low %v2613, %v2629
  %v2638 = vcombine.high %v2613, %v2629
  %v2639 = vcombine.low %v2620, %v2636
  %v2640 = vcombine.high %v2620, %v2636
  %2642 = vrot.lane.b32.xlu0 %v2638, 32
  %v2643 = vpop.permute.xlu0 %2642
  %2646 = vrot.lane.b32.xlu0 %v2639, 64
  %v2647 = vpop.permute.xlu0 %2646
  %2650 = vrot.lane.b32.xlu0 %v2640, 96
  %v2651 = vpop.permute.xlu0 %2650
  %v2653 = vsel %vm60, %v2637, %v2643
  %v2654 = vsel %vm2501, %v2653, %v2647
  %v2655 = vsel %vm2503, %v2654, %v2651
  %v2656 = vld [vmem:[%s4] sm:$0xff]
  %v2657 = vld [vmem:[%s4 + $0x8] sm:$0xff]
  %v2658 = vld [vmem:[%s4 + $0x10] sm:$0xff]
  %v2659 = vld [vmem:[%s4 + $0x18] sm:$0xff]
  %v2660 = vld [vmem:[%s4 + $0x20] sm:$0xff]
  %v2661 = vld [vmem:[%s4 + $0x28] sm:$0xff]
  %v2662 = vld [vmem:[%s4 + $0x30] sm:$0xff]
  %v2663 = vld [vmem:[%s4 + $0x38] sm:$0xff]
  %v2664 = vld [vmem:[%s4 + $0x40] sm:$0xff]
  %v2665 = vld [vmem:[%s4 + $0x48] sm:$0xff]
  %v2666 = vld [vmem:[%s4 + $0x50] sm:$0xff]
  %v2667 = vld [vmem:[%s4 + $0x58] sm:$0xff]
  %v2668 = vld [vmem:[%s4 + $0x60] sm:$0xff]
  %v2669 = vld [vmem:[%s4 + $0x68] sm:$0xff]
  %v2670 = vld [vmem:[%s4 + $0x70] sm:$0xff]
  %v2671 = vld [vmem:[%s4 + $0x78] sm:$0xff]
  %v2672 = vld [vmem:[%s5] sm:$0x1]
  %v2674 = vlaneseq
  %v2675 = vshrl.u32 %v2674, 7
  %v2676 = vsub.s32 0, %v2675
  %v2677 = vrot.slane %v2672, %v2676
  %2679 = vmatprep.subr.mxu0 0.0
  %2680 = vmatpush1.msra.mxu0 %v2656
  %2681 = vmatprep.subr.mxu0 0.0
  %2682 = vmatpush1.msra.mxu0 %v2657
  %2683 = vmatprep.subr.mxu0 0.0
  %2684 = vmatpush1.msra.mxu0 %v2658
  %2685 = vmatprep.subr.mxu0 0.0
  %2686 = vmatpush1.msra.mxu0 %v2659
  %2687 = vmatprep.subr.mxu0 0.0
  %2688 = vmatpush1.msra.mxu0 %v2660
  %2689 = vmatprep.subr.mxu0 0.0
  %2690 = vmatpush1.msra.mxu0 %v2661
  %2691 = vmatprep.subr.mxu0 0.0
  %2692 = vmatpush1.msra.mxu0 %v2662
  %2693 = vmatprep.subr.mxu0 0.0
  %2694 = vmatpush1.msra.mxu0 %v2663
  %2695 = vmatprep.subr.mxu0 0.0
  %2696 = vmatpush1.msra.mxu0 %v2664
  %2697 = vmatprep.subr.mxu0 0.0
  %2698 = vmatpush1.msra.mxu0 %v2665
  %2699 = vmatprep.subr.mxu0 0.0
  %2700 = vmatpush1.msra.mxu0 %v2666
  %2701 = vmatprep.subr.mxu0 0.0
  %2702 = vmatpush1.msra.mxu0 %v2667
  %2703 = vmatprep.subr.mxu0 0.0
  %2704 = vmatpush1.msra.mxu0 %v2668
  %2705 = vmatprep.subr.mxu0 0.0
  %2706 = vmatpush1.msra.mxu0 %v2669
  %2707 = vmatprep.subr.mxu0 0.0
  %2708 = vmatpush1.msra.mxu0 %v2670
  %2709 = vmatprep.subr.mxu0 0.0
  %2710 = vmatpush1.msra.mxu0 %v2671
  %2711 = vmatprep.subr.mxu0 0.0
  %2712 = vmatpush1.msra.mxu0 0.0
  %2713 = vmatprep.subr.mxu0 0.0
  %2714 = vmatpush1.msra.mxu0 0.0
  %2715 = vmatprep.subr.mxu0 0.0
  %2716 = vmatpush1.msra.mxu0 0.0
  %2717 = vmatprep.subr.mxu0 0.0
  %2718 = vmatpush1.msra.mxu0 0.0
  %2719 = vmatprep.subr.mxu0 0.0
  %2720 = vmatpush1.msra.mxu0 0.0
  %2721 = vmatprep.subr.mxu0 0.0
  %2722 = vmatpush1.msra.mxu0 0.0
  %2723 = vmatprep.subr.mxu0 0.0
  %2724 = vmatpush1.msra.mxu0 0.0
  %2725 = vmatprep.subr.mxu0 0.0
  %2726 = vmatpush1.msra.mxu0 0.0
  %2727 = vmatprep.subr.mxu0 0.0
  %2728 = vmatpush1.msra.mxu0 0.0
  %2729 = vmatprep.subr.mxu0 0.0
  %2730 = vmatpush1.msra.mxu0 0.0
  %2731 = vmatprep.subr.mxu0 0.0
  %2732 = vmatpush1.msra.mxu0 0.0
  %2733 = vmatprep.subr.mxu0 0.0
  %2734 = vmatpush1.msra.mxu0 0.0
  %2735 = vmatprep.subr.mxu0 0.0
  %2736 = vmatpush1.msra.mxu0 0.0
  %2737 = vmatprep.subr.mxu0 0.0
  %2738 = vmatpush1.msra.mxu0 0.0
  %2739 = vmatprep.subr.mxu0 0.0
  %2740 = vmatpush1.msra.mxu0 0.0
  %2741 = vmatprep.subr.mxu0 0.0
  %2742 = vmatpush1.msra.mxu0 0.0
  %2743 = vmatprep.mubr.f32.mxu0 0.0
  %2744 = vmatmul.mubr.f32.gmra.mrb[0].mxu0 %v2504
  %v2745 = vpop.f32.mrb[0].mxu0
  %v2746 = vadd.f32 %v2677, %v2745
  %v2747 = vpop.f32.mrb[0].mxu0
  %2748 = vmatprep.mubr.f32.mxu0 0.0
  %2749 = vmatmul.mubr.f32.gmra.mrb[0].mxu0 %v2655
  %v2750 = vpop.f32.mrb[0].mxu0
  %v2751 = vadd.f32 %v2677, %v2750
  %v2752 = vpop.f32.mrb[0].mxu0
  %2753 = vdwg.mxu0
  %v2754 = vadd.f32 %v2746, %v29
  %v2755 = vadd.f32 %v2751, %v30
  %v2756 = vlaneseq
  %v2757 = vand.u32 %v2756, 127
  %vm2758 = vcmp.lt.s32.totalorder %v2757, 32
  %v2759 = vsel %vm2758, 1, 0
  %v2760 = vcvt.s32.f32 %v2759
  %2761 = vadd.xlane.f32.xlu0 %v2754
  %v2762 = vpop.xlane.xlu0 %2761
  %2763 = vadd.xlane.f32.xlu0 %v2755
  %v2764 = vpop.xlane.xlu0 %2763
  %v2765 = vmul.f32 %v2762, 0.03125
  %v2766 = vmul.f32 %v2764, 0.03125
  %v2767 = vsub.f32 %v2754, %v2765
  %v2768 = vsub.f32 %v2755, %v2766
  %v2769 = vmul.f32 %v2767, %v2760
  %v2770 = vmul.f32 %v2768, %v2760
  %v2771 = vmul.f32 %v2769, %v2769
  %v2772 = vmul.f32 %v2770, %v2770
  %2773 = vadd.xlane.f32.xlu0 %v2771
  %v2774 = vpop.xlane.xlu0 %2773
  %2775 = vadd.xlane.f32.xlu0 %v2772
  %v2776 = vpop.xlane.xlu0 %2775
  %v2777 = vmul.f32 %v2774, 0.03125
  %v2778 = vmul.f32 %v2776, 0.03125
  %v2779 = vadd.f32 %v2777, 1e-12
  %v2780 = vadd.f32 %v2778, 1e-12
  %v2781 = vrsqrt.pop %v2779
  %v2782 = vrsqrt.pop %v2780
  %v2783 = vmul.f32 %v2769, %v2781
  %v2784 = vmul.f32 %v2770, %v2782
  %v2785 = vld [vmem:[%s6] sm:$0x1]
  %v2787 = vlaneseq
  %v2788 = vshrl.u32 %v2787, 7
  %v2789 = vsub.s32 0, %v2788
  %v2790 = vrot.slane %v2785, %v2789
  %v2792 = vmul.f32 %v2783, %v2790
  %v2793 = vmul.f32 %v2784, %v2790
  %v2794 = vld [vmem:[%s7] sm:$0x1]
  %v2796 = vlaneseq
  %v2797 = vshrl.u32 %v2796, 7
  %v2798 = vsub.s32 0, %v2797
  %v2799 = vrot.slane %v2794, %v2798
  %v2801 = vadd.f32 %v2792, %v2799
  %v2802 = vadd.f32 %v2793, %v2799
  %2803 = vst [vmem:[%s8] sm:$0xff] %v2801
  %2804 = vst [vmem:[%s8 + $0x8] sm:$0xff] %v2802
  // Predicated region
  $region34: #{bert_attention_forward.1} parent=0 // pred_check
    _
  $region35: #{bert_attention_forward.1} parent=0 // pred_check_branch
    %2806 = sbr.rel (0) target = $region37
  $region36: #{bert_attention_forward.1} parent=0 // pred_region
    _
  $region37: #{bert_attention_forward.1} parent=0 // pred_fallthru
    _
  // Predicated region
  $region38: #{bert_attention_forward.1} parent=0 // pred_check
    _
  $region39: #{bert_attention_forward.1} parent=0 // pred_check_branch
    %2808 = sbr.rel (0) target = $region41
  $region40: #{bert_attention_forward.1} parent=0 // pred_region
    _
  $region41: #{bert_attention_forward.1} parent=0 // pred_fallthru
    _

</llo_original>
